<compile_context>
chip_gen: v5e
topology: v5e:2x2
jax: 0.10.0
libtpu: 0.0.40
codegen_flags: <defaults>
</compile_context>

<pallas_src>
import jax
import jax.numpy as jnp
from jax.experimental import pallas as pl
from jax.experimental.pallas import tpu as pltpu

# ---- small DistilBERT-like config -------------------------------------------------
VOCAB = 100
MAX_POS = 16
HIDDEN = 32
N_HEADS = 4
HEAD_DIM = HIDDEN // N_HEADS
FFN = 64
N_LAYERS = 2
OUT_DIM = 16          # out_dimension > 0  -> reducer Linear(HIDDEN, OUT_DIM)
LN_EPS = 1e-12
OUT_PAD = 128         # lane-dense output width (multiple of 128); sliced back to OUT_DIM outside


def _layernorm(v, g, b):
    # single-pass statistics: one reduce of v and one of v*v (independent, not chained)
    n = v.shape[-1]
    s1 = jnp.sum(v, axis=-1, keepdims=True)
    s2 = jnp.sum(v * v, axis=-1, keepdims=True)
    mu = s1 * (1.0 / n)
    var = s2 * (1.0 / n) - mu * mu
    return (v - mu) * jax.lax.rsqrt(var + LN_EPS) * g + b


# ---- fused forward kernel: one grid step == one encoder layer ----------------------
def fused_encoder_kernel(emb_ref, pos_ref, mask_ref, eg_ref, eb_ref,
                         wq_ref, bq_ref, wk_ref, bk_ref, wv_ref, bv_ref,
                         wo_ref, bo_ref, g1_ref, be1_ref,
                         w1_ref, bf1_ref, w2_ref, bf2_ref, g2_ref, be2_ref,
                         rw_ref, rb_ref, o_ref, x_ref, ctx_ref):
    li = pl.program_id(0)
    B, S = mask_ref.shape                                         # static Python ints

    # ---- embeddings (word + positional) + embedding LayerNorm: first grid step only ----
    @pl.when(li == 0)
    def _():
        x0 = emb_ref[...] + pos_ref[...]                          # [B*S, H]
        x_ref[...] = _layernorm(x0, eg_ref[...], eb_ref[...])

    x = x_ref[...]                                                # [B*S, H] resident state
    neg = (mask_ref[...] - 1.0) * 1e9                             # [B, S] additive key mask

    # ---- multi-head self-attention for this layer ----
    # single [B*S,H]@[H,H] projections; 1/sqrt(d) already folded into Wq/bq
    q = jnp.dot(x, wq_ref[...], preferred_element_type=jnp.float32) + bq_ref[...]
    k = jnp.dot(x, wk_ref[...], preferred_element_type=jnp.float32) + bk_ref[...]
    v = jnp.dot(x, wv_ref[...], preferred_element_type=jnp.float32) + bv_ref[...]

    # statically unrolled (example, head) loop on contiguous lane slices: no head reshape,
    # no batched einsum, q @ k^T via dot_general contracting last dims (no explicit transpose)
    for b in range(B):
        r0 = b * S
        neg_b = neg[b:b + 1, :]                                   # [1, S]
        for h in range(N_HEADS):
            c0 = h * HEAD_DIM
            qb = jax.lax.slice(q, (r0, c0), (r0 + S, c0 + HEAD_DIM))
            kb = jax.lax.slice(k, (r0, c0), (r0 + S, c0 + HEAD_DIM))
            vb = jax.lax.slice(v, (r0, c0), (r0 + S, c0 + HEAD_DIM))
            scores = jax.lax.dot_general(
                qb, kb, (((1,), (1,)), ((), ())),
                preferred_element_type=jnp.float32) + neg_b       # [S, S]
            m = jnp.max(scores, axis=-1, keepdims=True)
            p = jnp.exp(scores - m)
            l = jnp.sum(p, axis=-1, keepdims=True)
            p = p * pl.reciprocal(l, approx=True)                 # EUP slot, not VALU divide
            ctx_ref[pl.ds(r0, S), pl.ds(c0, HEAD_DIM)] = jnp.dot(
                p, vb, preferred_element_type=jnp.float32)

    attn = jnp.dot(ctx_ref[...], wo_ref[...],
                   preferred_element_type=jnp.float32) + bo_ref[...]
    x = _layernorm(x + attn, g1_ref[...], be1_ref[...])           # sa_layer_norm

    # ---- feed-forward ----
    hh = jnp.dot(x, w1_ref[...], preferred_element_type=jnp.float32) + bf1_ref[...]
    hh = jax.nn.gelu(hh)  # tanh-approx GELU (EUP); HF uses exact erf GELU - numerically ~identical
    hh = jnp.dot(hh, w2_ref[...], preferred_element_type=jnp.float32) + bf2_ref[...]
    x = _layernorm(x + hh, g2_ref[...], be2_ref[...])             # output_layer_norm
    x_ref[...] = x

    # ---- CLS pooling + reducer: last grid step only (lane-dense [B, 128] store) ----
    @pl.when(li == pl.num_programs(0) - 1)
    def _():
        cls = jnp.concatenate([x[bb * S:bb * S + 1, :] for bb in range(B)], axis=0)  # [B, H]
        o_ref[...] = jnp.dot(cls, rw_ref[...],
                             preferred_element_type=jnp.float32) + rb_ref[...]


# ---- parameter init (deterministic, synthetic) -------------------------------------
def init_params(key):
    keys = jax.random.split(key, 3 + N_LAYERS)
    s = 0.02
    params = {
        'word_emb': jax.random.normal(keys[0], (VOCAB, HIDDEN), jnp.float32) * s,
        'pos_emb':  jax.random.normal(keys[1], (MAX_POS, HIDDEN), jnp.float32) * s,
        'emb_ln_g': jnp.ones((1, HIDDEN), jnp.float32),
        'emb_ln_b': jnp.zeros((1, HIDDEN), jnp.float32),
        'reducer_w': jax.random.normal(keys[2], (HIDDEN, OUT_DIM), jnp.float32) * s,
        'reducer_b': jnp.zeros((1, OUT_DIM), jnp.float32),
        'layers': [],
    }
    for li in range(N_LAYERS):
        lk = jax.random.split(keys[3 + li], 6)
        params['layers'].append(dict(
            wq=jax.random.normal(lk[0], (HIDDEN, HIDDEN), jnp.float32) * s,
            bq=jnp.zeros((1, HIDDEN), jnp.float32),
            wk=jax.random.normal(lk[1], (HIDDEN, HIDDEN), jnp.float32) * s,
            bk=jnp.zeros((1, HIDDEN), jnp.float32),
            wv=jax.random.normal(lk[2], (HIDDEN, HIDDEN), jnp.float32) * s,
            bv=jnp.zeros((1, HIDDEN), jnp.float32),
            wo=jax.random.normal(lk[3], (HIDDEN, HIDDEN), jnp.float32) * s,
            bo=jnp.zeros((1, HIDDEN), jnp.float32),
            g1=jnp.ones((1, HIDDEN), jnp.float32),
            be1=jnp.zeros((1, HIDDEN), jnp.float32),
            w1=jax.random.normal(lk[4], (HIDDEN, FFN), jnp.float32) * s,
            bf1=jnp.zeros((1, FFN), jnp.float32),
            w2=jax.random.normal(lk[5], (FFN, HIDDEN), jnp.float32) * s,
            bf2=jnp.zeros((1, HIDDEN), jnp.float32),
            g2=jnp.ones((1, HIDDEN), jnp.float32),
            be2=jnp.zeros((1, HIDDEN), jnp.float32),
        ))
    return params


# ---- TextEmbedding.forward equivalent ----------------------------------------------
def text_embedding_forward(params, inputs, trim_title=False):
    # inputs: int32 [B, 2, S]; channel 0 = input_ids, channel 1 = attention_mask
    if trim_title:
        inputs = inputs[:, :, :64]
    ids = inputs[:, 0]                               # [B, S]
    mask = inputs[:, 1].astype(jnp.float32)          # [B, S]
    B, S = ids.shape
    if S > MAX_POS:
        raise ValueError(f"sequence length {S} exceeds positional table MAX_POS={MAX_POS}")

    # TODO(synk): data-dependent embedding gather stays in plain JAX; at real shapes move it
    #             in-kernel via PrefetchScalarGridSpec + pl.Element row gather to avoid the
    #             extra [B,S,H] HBM round trip.
    emb = jnp.take(params['word_emb'], ids, axis=0).reshape(B * S, HIDDEN)   # [B*S, H]
    pos = jnp.tile(params['pos_emb'][:S], (B, 1))                            # [B*S, H]

    scale = 1.0 / (HEAD_DIM ** 0.5)
    stk = lambda name: jnp.stack([lp[name] for lp in params['layers']], axis=0)

    # fold 1/sqrt(head_dim) into the query projection (weights AND bias)
    wq_s = stk('wq') * scale
    bq_s = stk('bq') * scale

    # zero-pad the reducer to 128 output lanes (lane-dense store); sliced back after the call
    rw = jnp.zeros((HIDDEN, OUT_PAD), jnp.float32).at[:, :OUT_DIM].set(params['reducer_w'])
    rb = jnp.zeros((1, OUT_PAD), jnp.float32).at[:, :OUT_DIM].set(params['reducer_b'])

    layer_args = (wq_s, bq_s, stk('wk'), stk('bk'), stk('wv'), stk('bv'),
                  stk('wo'), stk('bo'), stk('g1'), stk('be1'),
                  stk('w1'), stk('bf1'), stk('w2'), stk('bf2'), stk('g2'), stk('be2'))

    args = (emb, pos, mask, params['emb_ln_g'], params['emb_ln_b'],
            *layer_args, rw, rb)

    def bcast_spec(a):
        # grid-invariant, whole-array resident (Pallas skips re-DMA when block index is unchanged)
        nd = a.ndim
        return pl.BlockSpec(a.shape, lambda li, _nd=nd: (0,) * _nd)

    def layer_spec(a):
        # stacked [N_LAYERS, ...]: stream exactly one layer's slab per grid step
        trailing = a.shape[1:]
        nd = len(trailing)
        return pl.BlockSpec((None,) + trailing, lambda li, _nd=nd: (li,) + (0,) * _nd)

    in_specs = ([bcast_spec(a) for a in (emb, pos, mask, params['emb_ln_g'], params['emb_ln_b'])]
                + [layer_spec(a) for a in layer_args]
                + [bcast_spec(rw), bcast_spec(rb)])

    out_full = pl.pallas_call(
        fused_encoder_kernel,
        out_shape=jax.ShapeDtypeStruct((B, OUT_PAD), jnp.float32),
        grid=(N_LAYERS,),
        in_specs=in_specs,
        out_specs=pl.BlockSpec((B, OUT_PAD), lambda li: (0, 0)),
        scratch_shapes=[pltpu.VMEM((B * S, HIDDEN), jnp.float32),   # x (resident hidden state)
                        pltpu.VMEM((B * S, HIDDEN), jnp.float32)],  # ctx (attention context)
        compiler_params=pltpu.CompilerParams(
            dimension_semantics=("arbitrary",),          # layer axis carries state; not parallel
            vmem_limit_bytes=32 * 1024 * 1024),
    )(*args)

    return out_full[:, :OUT_DIM]


if __name__ == "__main__":
    key = jax.random.PRNGKey(0)
    pkey, ikey = jax.random.split(key)
    params = init_params(pkey)

    B, S = 2, 8
    ids = jax.random.randint(ikey, (B, S), 0, VOCAB, dtype=jnp.int32)
    mask = jnp.array([[1, 1, 1, 1, 1, 1, 1, 1],
                      [1, 1, 1, 1, 1, 0, 0, 0]], dtype=jnp.int32)
    inputs = jnp.stack([ids, mask], axis=1)          # [B, 2, S]

    out = text_embedding_forward(params, inputs, trim_title=False)
    out = jax.block_until_ready(out)
    assert out.shape == (B, OUT_DIM) and out.dtype == jnp.float32
    print("KERNEL_OK")
</pallas_src>

<mosaic_0001>
module attributes {stable_mosaic.version = 11 : i64} {
  func.func @fused_encoder_kernel(%arg0: i32, %arg1: memref<16x32xf32, #tpu.memory_space<vmem>>, %arg2: memref<16x32xf32, #tpu.memory_space<vmem>>, %arg3: memref<2x8xf32, #tpu.memory_space<vmem>>, %arg4: memref<1x32xf32, #tpu.memory_space<vmem>>, %arg5: memref<1x32xf32, #tpu.memory_space<vmem>>, %arg6: memref<1x32x32xf32, #tpu.memory_space<vmem>>, %arg7: memref<1x1x32xf32, #tpu.memory_space<vmem>>, %arg8: memref<1x32x32xf32, #tpu.memory_space<vmem>>, %arg9: memref<1x1x32xf32, #tpu.memory_space<vmem>>, %arg10: memref<1x32x32xf32, #tpu.memory_space<vmem>>, %arg11: memref<1x1x32xf32, #tpu.memory_space<vmem>>, %arg12: memref<1x32x32xf32, #tpu.memory_space<vmem>>, %arg13: memref<1x1x32xf32, #tpu.memory_space<vmem>>, %arg14: memref<1x1x32xf32, #tpu.memory_space<vmem>>, %arg15: memref<1x1x32xf32, #tpu.memory_space<vmem>>, %arg16: memref<1x32x64xf32, #tpu.memory_space<vmem>>, %arg17: memref<1x1x64xf32, #tpu.memory_space<vmem>>, %arg18: memref<1x64x32xf32, #tpu.memory_space<vmem>>, %arg19: memref<1x1x32xf32, #tpu.memory_space<vmem>>, %arg20: memref<1x1x32xf32, #tpu.memory_space<vmem>>, %arg21: memref<1x1x32xf32, #tpu.memory_space<vmem>>, %arg22: memref<32x128xf32, #tpu.memory_space<vmem>>, %arg23: memref<1x128xf32, #tpu.memory_space<vmem>>, %arg24: memref<2x128xf32, #tpu.memory_space<vmem>>, %arg25: memref<16x32xf32, #tpu.memory_space<vmem>>, %arg26: memref<16x32xf32, #tpu.memory_space<vmem>>) attributes {dimension_semantics = [#tpu.dimension_semantics<arbitrary>], iteration_bounds = array<i64: 2>, scalar_prefetch = 0 : i64, scratch_operands = 2 : i64, tpu.core_type = #tpu.core_type<tc>, window_params = [{pipeline_mode = #tpu.pipeline_mode<synchronous>, transform_indices = @transform_0, window_bounds = array<i64: 16, 32>}, {pipeline_mode = #tpu.pipeline_mode<synchronous>, transform_indices = @transform_1, window_bounds = array<i64: 16, 32>}, {pipeline_mode = #tpu.pipeline_mode<synchronous>, transform_indices = @transform_2, window_bounds = array<i64: 2, 8>}, {pipeline_mode = #tpu.pipeline_mode<synchronous>, transform_indices = @transform_3, window_bounds = array<i64: 1, 32>}, {pipeline_mode = #tpu.pipeline_mode<synchronous>, transform_indices = @transform_4, window_bounds = array<i64: 1, 32>}, {transform_indices = @transform_5, window_bounds = array<i64: 1, 32, 32>}, {transform_indices = @transform_6, window_bounds = array<i64: 1, 1, 32>}, {transform_indices = @transform_7, window_bounds = array<i64: 1, 32, 32>}, {transform_indices = @transform_8, window_bounds = array<i64: 1, 1, 32>}, {transform_indices = @transform_9, window_bounds = array<i64: 1, 32, 32>}, {transform_indices = @transform_10, window_bounds = array<i64: 1, 1, 32>}, {transform_indices = @transform_11, window_bounds = array<i64: 1, 32, 32>}, {transform_indices = @transform_12, window_bounds = array<i64: 1, 1, 32>}, {transform_indices = @transform_13, window_bounds = array<i64: 1, 1, 32>}, {transform_indices = @transform_14, window_bounds = array<i64: 1, 1, 32>}, {transform_indices = @transform_15, window_bounds = array<i64: 1, 32, 64>}, {transform_indices = @transform_16, window_bounds = array<i64: 1, 1, 64>}, {transform_indices = @transform_17, window_bounds = array<i64: 1, 64, 32>}, {transform_indices = @transform_18, window_bounds = array<i64: 1, 1, 32>}, {transform_indices = @transform_19, window_bounds = array<i64: 1, 1, 32>}, {transform_indices = @transform_20, window_bounds = array<i64: 1, 1, 32>}, {pipeline_mode = #tpu.pipeline_mode<synchronous>, transform_indices = @transform_21, window_bounds = array<i64: 32, 128>}, {pipeline_mode = #tpu.pipeline_mode<synchronous>, transform_indices = @transform_22, window_bounds = array<i64: 1, 128>}, {pipeline_mode = #tpu.pipeline_mode<synchronous>, transform_indices = @transform_23, window_bounds = array<i64: 2, 128>}]} {
    %c0_i32 = arith.constant 0 : i32
    %0 = arith.cmpi eq, %arg0, %c0_i32 : i32
    %1 = arith.extui %0 : i1 to i32
    %c0_i32_0 = arith.constant 0 : i32
    %2 = arith.cmpi ne, %1, %c0_i32_0 : i32
    scf.if %2 {
      %c0_123 = arith.constant 0 : index
      %c0_124 = arith.constant 0 : index
      %269 = vector.load %arg1[%c0_123, %c0_124] : memref<16x32xf32, #tpu.memory_space<vmem>>, vector<16x32xf32>
      %c0_125 = arith.constant 0 : index
      %c0_126 = arith.constant 0 : index
      %270 = vector.load %arg2[%c0_125, %c0_126] : memref<16x32xf32, #tpu.memory_space<vmem>>, vector<16x32xf32>
      %271 = arith.addf %269, %270 : vector<16x32xf32>
      %c0_127 = arith.constant 0 : index
      %c0_128 = arith.constant 0 : index
      %272 = vector.load %arg4[%c0_127, %c0_128] : memref<1x32xf32, #tpu.memory_space<vmem>>, vector<1x32xf32>
      %c0_129 = arith.constant 0 : index
      %c0_130 = arith.constant 0 : index
      %273 = vector.load %arg5[%c0_129, %c0_130] : memref<1x32xf32, #tpu.memory_space<vmem>>, vector<1x32xf32>
      %cst_131 = arith.constant dense<0.000000e+00> : vector<16xf32>
      %274 = vector.multi_reduction <add>, %271, %cst_131 [1] : vector<16x32xf32> to vector<16xf32>
      %275 = vector.shape_cast %274 : vector<16xf32> to vector<16x1xf32>
      %276 = arith.mulf %271, %271 : vector<16x32xf32>
      %cst_132 = arith.constant dense<0.000000e+00> : vector<16xf32>
      %277 = vector.multi_reduction <add>, %276, %cst_132 [1] : vector<16x32xf32> to vector<16xf32>
      %278 = vector.shape_cast %277 : vector<16xf32> to vector<16x1xf32>
      %cst_133 = arith.constant 3.125000e-02 : f32
      %279 = vector.broadcast %cst_133 : f32 to vector<16x1xf32>
      %280 = arith.mulf %275, %279 : vector<16x1xf32>
      %cst_134 = arith.constant 3.125000e-02 : f32
      %281 = vector.broadcast %cst_134 : f32 to vector<16x1xf32>
      %282 = arith.mulf %278, %281 : vector<16x1xf32>
      %283 = arith.mulf %280, %280 : vector<16x1xf32>
      %284 = arith.subf %282, %283 : vector<16x1xf32>
      %285 = vector.broadcast %280 : vector<16x1xf32> to vector<16x32xf32>
      %286 = arith.subf %271, %285 : vector<16x32xf32>
      %cst_135 = arith.constant 9.99999996E-13 : f32
      %287 = vector.broadcast %cst_135 : f32 to vector<16x1xf32>
      %288 = arith.addf %284, %287 : vector<16x1xf32>
      %289 = math.rsqrt %288 : vector<16x1xf32>
      %290 = vector.broadcast %289 : vector<16x1xf32> to vector<16x32xf32>
      %291 = arith.mulf %286, %290 : vector<16x32xf32>
      %292 = vector.broadcast %272 : vector<1x32xf32> to vector<16x32xf32>
      %293 = arith.mulf %291, %292 : vector<16x32xf32>
      %294 = vector.broadcast %273 : vector<1x32xf32> to vector<16x32xf32>
      %295 = arith.addf %293, %294 : vector<16x32xf32>
      %c0_136 = arith.constant 0 : index
      %c0_137 = arith.constant 0 : index
      %296 = vector.load %arg25[%c0_136, %c0_137] : memref<16x32xf32, #tpu.memory_space<vmem>>, vector<16x32xf32>
      tpu.vector_store %arg25[%c0_136, %c0_137], %295 {strides = array<i32>} : memref<16x32xf32, #tpu.memory_space<vmem>>, vector<16x32xf32>,
    } else {
    }
    %c0 = arith.constant 0 : index
    %c0_1 = arith.constant 0 : index
    %3 = vector.load %arg25[%c0, %c0_1] : memref<16x32xf32, #tpu.memory_space<vmem>>, vector<16x32xf32>
    %c0_2 = arith.constant 0 : index
    %c0_3 = arith.constant 0 : index
    %4 = vector.load %arg3[%c0_2, %c0_3] : memref<2x8xf32, #tpu.memory_space<vmem>>, vector<2x8xf32>
    %cst = arith.constant 1.000000e+00 : f32
    %5 = vector.broadcast %cst : f32 to vector<2x8xf32>
    %6 = arith.subf %4, %5 : vector<2x8xf32>
    %cst_4 = arith.constant 1.000000e+09 : f32
    %7 = vector.broadcast %cst_4 : f32 to vector<2x8xf32>
    %8 = arith.mulf %6, %7 : vector<2x8xf32>
    %c0_5 = arith.constant 0 : index
    %c0_6 = arith.constant 0 : index
    %c0_7 = arith.constant 0 : index
    %9 = vector.load %arg6[%c0_5, %c0_6, %c0_7] : memref<1x32x32xf32, #tpu.memory_space<vmem>>, vector<1x32x32xf32>
    %10 = vector.shape_cast %9 : vector<1x32x32xf32> to vector<32x32xf32>
    %cst_8 = arith.constant dense<0.000000e+00> : vector<16x32xf32>
    %11 = tpu.matmul %3, %10, %cst_8 {dimension_numbers = #tpu.dot_dimension_numbers<[1], [0], [0], [1], [0, 0, 1, 1], [], []>} : vector<16x32xf32>, vector<32x32xf32>, vector<16x32xf32> -> vector<16x32xf32>
    %c0_9 = arith.constant 0 : index
    %c0_10 = arith.constant 0 : index
    %c0_11 = arith.constant 0 : index
    %12 = vector.load %arg7[%c0_9, %c0_10, %c0_11] : memref<1x1x32xf32, #tpu.memory_space<vmem>>, vector<1x1x32xf32>
    %13 = vector.shape_cast %12 : vector<1x1x32xf32> to vector<1x32xf32>
    %14 = vector.broadcast %13 : vector<1x32xf32> to vector<16x32xf32>
    %15 = arith.addf %11, %14 : vector<16x32xf32>
    %c0_12 = arith.constant 0 : index
    %c0_13 = arith.constant 0 : index
    %c0_14 = arith.constant 0 : index
    %16 = vector.load %arg8[%c0_12, %c0_13, %c0_14] : memref<1x32x32xf32, #tpu.memory_space<vmem>>, vector<1x32x32xf32>
    %17 = vector.shape_cast %16 : vector<1x32x32xf32> to vector<32x32xf32>
    %cst_15 = arith.constant dense<0.000000e+00> : vector<16x32xf32>
    %18 = tpu.matmul %3, %17, %cst_15 {dimension_numbers = #tpu.dot_dimension_numbers<[1], [0], [0], [1], [0, 0, 1, 1], [], []>} : vector<16x32xf32>, vector<32x32xf32>, vector<16x32xf32> -> vector<16x32xf32>
    %c0_16 = arith.constant 0 : index
    %c0_17 = arith.constant 0 : index
    %c0_18 = arith.constant 0 : index
    %19 = vector.load %arg9[%c0_16, %c0_17, %c0_18] : memref<1x1x32xf32, #tpu.memory_space<vmem>>, vector<1x1x32xf32>
    %20 = vector.shape_cast %19 : vector<1x1x32xf32> to vector<1x32xf32>
    %21 = vector.broadcast %20 : vector<1x32xf32> to vector<16x32xf32>
    %22 = arith.addf %18, %21 : vector<16x32xf32>
    %c0_19 = arith.constant 0 : index
    %c0_20 = arith.constant 0 : index
    %c0_21 = arith.constant 0 : index
    %23 = vector.load %arg10[%c0_19, %c0_20, %c0_21] : memref<1x32x32xf32, #tpu.memory_space<vmem>>, vector<1x32x32xf32>
    %24 = vector.shape_cast %23 : vector<1x32x32xf32> to vector<32x32xf32>
    %cst_22 = arith.constant dense<0.000000e+00> : vector<16x32xf32>
    %25 = tpu.matmul %3, %24, %cst_22 {dimension_numbers = #tpu.dot_dimension_numbers<[1], [0], [0], [1], [0, 0, 1, 1], [], []>} : vector<16x32xf32>, vector<32x32xf32>, vector<16x32xf32> -> vector<16x32xf32>
    %c0_23 = arith.constant 0 : index
    %c0_24 = arith.constant 0 : index
    %c0_25 = arith.constant 0 : index
    %26 = vector.load %arg11[%c0_23, %c0_24, %c0_25] : memref<1x1x32xf32, #tpu.memory_space<vmem>>, vector<1x1x32xf32>
    %27 = vector.shape_cast %26 : vector<1x1x32xf32> to vector<1x32xf32>
    %28 = vector.broadcast %27 : vector<1x32xf32> to vector<16x32xf32>
    %29 = arith.addf %25, %28 : vector<16x32xf32>
    %30 = vector.extract_strided_slice %8 {offsets = [0, 0], sizes = [1, 8], strides = [1, 1]} : vector<2x8xf32> to vector<1x8xf32>
    %31 = vector.extract_strided_slice %15 {offsets = [0, 0], sizes = [8, 8], strides = [1, 1]} : vector<16x32xf32> to vector<8x8xf32>
    %32 = vector.extract_strided_slice %22 {offsets = [0, 0], sizes = [8, 8], strides = [1, 1]} : vector<16x32xf32> to vector<8x8xf32>
    %33 = vector.extract_strided_slice %29 {offsets = [0, 0], sizes = [8, 8], strides = [1, 1]} : vector<16x32xf32> to vector<8x8xf32>
    %cst_26 = arith.constant dense<0.000000e+00> : vector<8x8xf32>
    %34 = tpu.matmul %31, %32, %cst_26 {dimension_numbers = #tpu.dot_dimension_numbers<[1], [1], [0], [0], [0, 0, 1, 0], [], []>} : vector<8x8xf32>, vector<8x8xf32>, vector<8x8xf32> -> vector<8x8xf32>
    %35 = vector.broadcast %30 : vector<1x8xf32> to vector<8x8xf32>
    %36 = arith.addf %34, %35 : vector<8x8xf32>
    %cst_27 = arith.constant dense<0xFF800000> : vector<8xf32>
    %37 = vector.multi_reduction <maximumf>, %36, %cst_27 [1] : vector<8x8xf32> to vector<8xf32>
    %38 = vector.shape_cast %37 : vector<8xf32> to vector<8x1xf32>
    %39 = vector.broadcast %38 : vector<8x1xf32> to vector<8x8xf32>
    %40 = arith.subf %36, %39 : vector<8x8xf32>
    %41 = math.exp %40 : vector<8x8xf32>
    %cst_28 = arith.constant dense<0.000000e+00> : vector<8xf32>
    %42 = vector.multi_reduction <add>, %41, %cst_28 [1] : vector<8x8xf32> to vector<8xf32>
    %43 = vector.shape_cast %42 : vector<8xf32> to vector<8x1xf32>
    %44 = tpu.reciprocal %43 {approx = true} : vector<8x1xf32> -> vector<8x1xf32>
    %45 = vector.broadcast %44 : vector<8x1xf32> to vector<8x8xf32>
    %46 = arith.mulf %41, %45 : vector<8x8xf32>
    %cst_29 = arith.constant dense<0.000000e+00> : vector<8x8xf32>
    %47 = tpu.matmul %46, %33, %cst_29 {dimension_numbers = #tpu.dot_dimension_numbers<[1], [0], [0], [1], [0, 0, 1, 1], [], []>} : vector<8x8xf32>, vector<8x8xf32>, vector<8x8xf32> -> vector<8x8xf32>
    %c0_30 = arith.constant 0 : index
    %c0_31 = arith.constant 0 : index
    %48 = vector.load %arg26[%c0_30, %c0_31] : memref<16x32xf32, #tpu.memory_space<vmem>>, vector<8x8xf32>
    tpu.vector_store %arg26[%c0_30, %c0_31], %47 {strides = array<i32>} : memref<16x32xf32, #tpu.memory_space<vmem>>, vector<8x8xf32>,
    %49 = vector.extract_strided_slice %15 {offsets = [0, 8], sizes = [8, 8], strides = [1, 1]} : vector<16x32xf32> to vector<8x8xf32>
    %50 = vector.extract_strided_slice %22 {offsets = [0, 8], sizes = [8, 8], strides = [1, 1]} : vector<16x32xf32> to vector<8x8xf32>
    %51 = vector.extract_strided_slice %29 {offsets = [0, 8], sizes = [8, 8], strides = [1, 1]} : vector<16x32xf32> to vector<8x8xf32>
    %cst_32 = arith.constant dense<0.000000e+00> : vector<8x8xf32>
    %52 = tpu.matmul %49, %50, %cst_32 {dimension_numbers = #tpu.dot_dimension_numbers<[1], [1], [0], [0], [0, 0, 1, 0], [], []>} : vector<8x8xf32>, vector<8x8xf32>, vector<8x8xf32> -> vector<8x8xf32>
    %53 = vector.broadcast %30 : vector<1x8xf32> to vector<8x8xf32>
    %54 = arith.addf %52, %53 : vector<8x8xf32>
    %cst_33 = arith.constant dense<0xFF800000> : vector<8xf32>
    %55 = vector.multi_reduction <maximumf>, %54, %cst_33 [1] : vector<8x8xf32> to vector<8xf32>
    %56 = vector.shape_cast %55 : vector<8xf32> to vector<8x1xf32>
    %57 = vector.broadcast %56 : vector<8x1xf32> to vector<8x8xf32>
    %58 = arith.subf %54, %57 : vector<8x8xf32>
    %59 = math.exp %58 : vector<8x8xf32>
    %cst_34 = arith.constant dense<0.000000e+00> : vector<8xf32>
    %60 = vector.multi_reduction <add>, %59, %cst_34 [1] : vector<8x8xf32> to vector<8xf32>
    %61 = vector.shape_cast %60 : vector<8xf32> to vector<8x1xf32>
    %62 = tpu.reciprocal %61 {approx = true} : vector<8x1xf32> -> vector<8x1xf32>
    %63 = vector.broadcast %62 : vector<8x1xf32> to vector<8x8xf32>
    %64 = arith.mulf %59, %63 : vector<8x8xf32>
    %cst_35 = arith.constant dense<0.000000e+00> : vector<8x8xf32>
    %65 = tpu.matmul %64, %51, %cst_35 {dimension_numbers = #tpu.dot_dimension_numbers<[1], [0], [0], [1], [0, 0, 1, 1], [], []>} : vector<8x8xf32>, vector<8x8xf32>, vector<8x8xf32> -> vector<8x8xf32>
    %c0_36 = arith.constant 0 : index
    %c8 = arith.constant 8 : index
    %66 = vector.load %arg26[%c0_36, %c8] : memref<16x32xf32, #tpu.memory_space<vmem>>, vector<8x8xf32>
    tpu.vector_store %arg26[%c0_36, %c8], %65 {strides = array<i32>} : memref<16x32xf32, #tpu.memory_space<vmem>>, vector<8x8xf32>,
    %67 = vector.extract_strided_slice %15 {offsets = [0, 16], sizes = [8, 8], strides = [1, 1]} : vector<16x32xf32> to vector<8x8xf32>
    %68 = vector.extract_strided_slice %22 {offsets = [0, 16], sizes = [8, 8], strides = [1, 1]} : vector<16x32xf32> to vector<8x8xf32>
    %69 = vector.extract_strided_slice %29 {offsets = [0, 16], sizes = [8, 8], strides = [1, 1]} : vector<16x32xf32> to vector<8x8xf32>
    %cst_37 = arith.constant dense<0.000000e+00> : vector<8x8xf32>
    %70 = tpu.matmul %67, %68, %cst_37 {dimension_numbers = #tpu.dot_dimension_numbers<[1], [1], [0], [0], [0, 0, 1, 0], [], []>} : vector<8x8xf32>, vector<8x8xf32>, vector<8x8xf32> -> vector<8x8xf32>
    %71 = vector.broadcast %30 : vector<1x8xf32> to vector<8x8xf32>
    %72 = arith.addf %70, %71 : vector<8x8xf32>
    %cst_38 = arith.constant dense<0xFF800000> : vector<8xf32>
    %73 = vector.multi_reduction <maximumf>, %72, %cst_38 [1] : vector<8x8xf32> to vector<8xf32>
    %74 = vector.shape_cast %73 : vector<8xf32> to vector<8x1xf32>
    %75 = vector.broadcast %74 : vector<8x1xf32> to vector<8x8xf32>
    %76 = arith.subf %72, %75 : vector<8x8xf32>
    %77 = math.exp %76 : vector<8x8xf32>
    %cst_39 = arith.constant dense<0.000000e+00> : vector<8xf32>
    %78 = vector.multi_reduction <add>, %77, %cst_39 [1] : vector<8x8xf32> to vector<8xf32>
    %79 = vector.shape_cast %78 : vector<8xf32> to vector<8x1xf32>
    %80 = tpu.reciprocal %79 {approx = true} : vector<8x1xf32> -> vector<8x1xf32>
    %81 = vector.broadcast %80 : vector<8x1xf32> to vector<8x8xf32>
    %82 = arith.mulf %77, %81 : vector<8x8xf32>
    %cst_40 = arith.constant dense<0.000000e+00> : vector<8x8xf32>
    %83 = tpu.matmul %82, %69, %cst_40 {dimension_numbers = #tpu.dot_dimension_numbers<[1], [0], [0], [1], [0, 0, 1, 1], [], []>} : vector<8x8xf32>, vector<8x8xf32>, vector<8x8xf32> -> vector<8x8xf32>
    %c0_41 = arith.constant 0 : index
    %c16 = arith.constant 16 : index
    %84 = vector.load %arg26[%c0_41, %c16] : memref<16x32xf32, #tpu.memory_space<vmem>>, vector<8x8xf32>
    tpu.vector_store %arg26[%c0_41, %c16], %83 {strides = array<i32>} : memref<16x32xf32, #tpu.memory_space<vmem>>, vector<8x8xf32>,
    %85 = vector.extract_strided_slice %15 {offsets = [0, 24], sizes = [8, 8], strides = [1, 1]} : vector<16x32xf32> to vector<8x8xf32>
    %86 = vector.extract_strided_slice %22 {offsets = [0, 24], sizes = [8, 8], strides = [1, 1]} : vector<16x32xf32> to vector<8x8xf32>
    %87 = vector.extract_strided_slice %29 {offsets = [0, 24], sizes = [8, 8], strides = [1, 1]} : vector<16x32xf32> to vector<8x8xf32>
    %cst_42 = arith.constant dense<0.000000e+00> : vector<8x8xf32>
    %88 = tpu.matmul %85, %86, %cst_42 {dimension_numbers = #tpu.dot_dimension_numbers<[1], [1], [0], [0], [0, 0, 1, 0], [], []>} : vector<8x8xf32>, vector<8x8xf32>, vector<8x8xf32> -> vector<8x8xf32>
    %89 = vector.broadcast %30 : vector<1x8xf32> to vector<8x8xf32>
    %90 = arith.addf %88, %89 : vector<8x8xf32>
    %cst_43 = arith.constant dense<0xFF800000> : vector<8xf32>
    %91 = vector.multi_reduction <maximumf>, %90, %cst_43 [1] : vector<8x8xf32> to vector<8xf32>
    %92 = vector.shape_cast %91 : vector<8xf32> to vector<8x1xf32>
    %93 = vector.broadcast %92 : vector<8x1xf32> to vector<8x8xf32>
    %94 = arith.subf %90, %93 : vector<8x8xf32>
    %95 = math.exp %94 : vector<8x8xf32>
    %cst_44 = arith.constant dense<0.000000e+00> : vector<8xf32>
    %96 = vector.multi_reduction <add>, %95, %cst_44 [1] : vector<8x8xf32> to vector<8xf32>
    %97 = vector.shape_cast %96 : vector<8xf32> to vector<8x1xf32>
    %98 = tpu.reciprocal %97 {approx = true} : vector<8x1xf32> -> vector<8x1xf32>
    %99 = vector.broadcast %98 : vector<8x1xf32> to vector<8x8xf32>
    %100 = arith.mulf %95, %99 : vector<8x8xf32>
    %cst_45 = arith.constant dense<0.000000e+00> : vector<8x8xf32>
    %101 = tpu.matmul %100, %87, %cst_45 {dimension_numbers = #tpu.dot_dimension_numbers<[1], [0], [0], [1], [0, 0, 1, 1], [], []>} : vector<8x8xf32>, vector<8x8xf32>, vector<8x8xf32> -> vector<8x8xf32>
    %c0_46 = arith.constant 0 : index
    %c24 = arith.constant 24 : index
    %102 = vector.load %arg26[%c0_46, %c24] : memref<16x32xf32, #tpu.memory_space<vmem>>, vector<8x8xf32>
    tpu.vector_store %arg26[%c0_46, %c24], %101 {strides = array<i32>} : memref<16x32xf32, #tpu.memory_space<vmem>>, vector<8x8xf32>,
    %103 = vector.extract_strided_slice %8 {offsets = [1, 0], sizes = [1, 8], strides = [1, 1]} : vector<2x8xf32> to vector<1x8xf32>
    %104 = vector.extract_strided_slice %15 {offsets = [8, 0], sizes = [8, 8], strides = [1, 1]} : vector<16x32xf32> to vector<8x8xf32>
    %105 = vector.extract_strided_slice %22 {offsets = [8, 0], sizes = [8, 8], strides = [1, 1]} : vector<16x32xf32> to vector<8x8xf32>
    %106 = vector.extract_strided_slice %29 {offsets = [8, 0], sizes = [8, 8], strides = [1, 1]} : vector<16x32xf32> to vector<8x8xf32>
    %cst_47 = arith.constant dense<0.000000e+00> : vector<8x8xf32>
    %107 = tpu.matmul %104, %105, %cst_47 {dimension_numbers = #tpu.dot_dimension_numbers<[1], [1], [0], [0], [0, 0, 1, 0], [], []>} : vector<8x8xf32>, vector<8x8xf32>, vector<8x8xf32> -> vector<8x8xf32>
    %108 = vector.broadcast %103 : vector<1x8xf32> to vector<8x8xf32>
    %109 = arith.addf %107, %108 : vector<8x8xf32>
    %cst_48 = arith.constant dense<0xFF800000> : vector<8xf32>
    %110 = vector.multi_reduction <maximumf>, %109, %cst_48 [1] : vector<8x8xf32> to vector<8xf32>
    %111 = vector.shape_cast %110 : vector<8xf32> to vector<8x1xf32>
    %112 = vector.broadcast %111 : vector<8x1xf32> to vector<8x8xf32>
    %113 = arith.subf %109, %112 : vector<8x8xf32>
    %114 = math.exp %113 : vector<8x8xf32>
    %cst_49 = arith.constant dense<0.000000e+00> : vector<8xf32>
    %115 = vector.multi_reduction <add>, %114, %cst_49 [1] : vector<8x8xf32> to vector<8xf32>
    %116 = vector.shape_cast %115 : vector<8xf32> to vector<8x1xf32>
    %117 = tpu.reciprocal %116 {approx = true} : vector<8x1xf32> -> vector<8x1xf32>
    %118 = vector.broadcast %117 : vector<8x1xf32> to vector<8x8xf32>
    %119 = arith.mulf %114, %118 : vector<8x8xf32>
    %cst_50 = arith.constant dense<0.000000e+00> : vector<8x8xf32>
    %120 = tpu.matmul %119, %106, %cst_50 {dimension_numbers = #tpu.dot_dimension_numbers<[1], [0], [0], [1], [0, 0, 1, 1], [], []>} : vector<8x8xf32>, vector<8x8xf32>, vector<8x8xf32> -> vector<8x8xf32>
    %c8_51 = arith.constant 8 : index
    %c0_52 = arith.constant 0 : index
    %121 = vector.load %arg26[%c8_51, %c0_52] : memref<16x32xf32, #tpu.memory_space<vmem>>, vector<8x8xf32>
    tpu.vector_store %arg26[%c8_51, %c0_52], %120 {strides = array<i32>} : memref<16x32xf32, #tpu.memory_space<vmem>>, vector<8x8xf32>,
    %122 = vector.extract_strided_slice %15 {offsets = [8, 8], sizes = [8, 8], strides = [1, 1]} : vector<16x32xf32> to vector<8x8xf32>
    %123 = vector.extract_strided_slice %22 {offsets = [8, 8], sizes = [8, 8], strides = [1, 1]} : vector<16x32xf32> to vector<8x8xf32>
    %124 = vector.extract_strided_slice %29 {offsets = [8, 8], sizes = [8, 8], strides = [1, 1]} : vector<16x32xf32> to vector<8x8xf32>
    %cst_53 = arith.constant dense<0.000000e+00> : vector<8x8xf32>
    %125 = tpu.matmul %122, %123, %cst_53 {dimension_numbers = #tpu.dot_dimension_numbers<[1], [1], [0], [0], [0, 0, 1, 0], [], []>} : vector<8x8xf32>, vector<8x8xf32>, vector<8x8xf32> -> vector<8x8xf32>
    %126 = vector.broadcast %103 : vector<1x8xf32> to vector<8x8xf32>
    %127 = arith.addf %125, %126 : vector<8x8xf32>
    %cst_54 = arith.constant dense<0xFF800000> : vector<8xf32>
    %128 = vector.multi_reduction <maximumf>, %127, %cst_54 [1] : vector<8x8xf32> to vector<8xf32>
    %129 = vector.shape_cast %128 : vector<8xf32> to vector<8x1xf32>
    %130 = vector.broadcast %129 : vector<8x1xf32> to vector<8x8xf32>
    %131 = arith.subf %127, %130 : vector<8x8xf32>
    %132 = math.exp %131 : vector<8x8xf32>
    %cst_55 = arith.constant dense<0.000000e+00> : vector<8xf32>
    %133 = vector.multi_reduction <add>, %132, %cst_55 [1] : vector<8x8xf32> to vector<8xf32>
    %134 = vector.shape_cast %133 : vector<8xf32> to vector<8x1xf32>
    %135 = tpu.reciprocal %134 {approx = true} : vector<8x1xf32> -> vector<8x1xf32>
    %136 = vector.broadcast %135 : vector<8x1xf32> to vector<8x8xf32>
    %137 = arith.mulf %132, %136 : vector<8x8xf32>
    %cst_56 = arith.constant dense<0.000000e+00> : vector<8x8xf32>
    %138 = tpu.matmul %137, %124, %cst_56 {dimension_numbers = #tpu.dot_dimension_numbers<[1], [0], [0], [1], [0, 0, 1, 1], [], []>} : vector<8x8xf32>, vector<8x8xf32>, vector<8x8xf32> -> vector<8x8xf32>
    %c8_57 = arith.constant 8 : index
    %c8_58 = arith.constant 8 : index
    %139 = vector.load %arg26[%c8_57, %c8_58] : memref<16x32xf32, #tpu.memory_space<vmem>>, vector<8x8xf32>
    tpu.vector_store %arg26[%c8_57, %c8_58], %138 {strides = array<i32>} : memref<16x32xf32, #tpu.memory_space<vmem>>, vector<8x8xf32>,
    %140 = vector.extract_strided_slice %15 {offsets = [8, 16], sizes = [8, 8], strides = [1, 1]} : vector<16x32xf32> to vector<8x8xf32>
    %141 = vector.extract_strided_slice %22 {offsets = [8, 16], sizes = [8, 8], strides = [1, 1]} : vector<16x32xf32> to vector<8x8xf32>
    %142 = vector.extract_strided_slice %29 {offsets = [8, 16], sizes = [8, 8], strides = [1, 1]} : vector<16x32xf32> to vector<8x8xf32>
    %cst_59 = arith.constant dense<0.000000e+00> : vector<8x8xf32>
    %143 = tpu.matmul %140, %141, %cst_59 {dimension_numbers = #tpu.dot_dimension_numbers<[1], [1], [0], [0], [0, 0, 1, 0], [], []>} : vector<8x8xf32>, vector<8x8xf32>, vector<8x8xf32> -> vector<8x8xf32>
    %144 = vector.broadcast %103 : vector<1x8xf32> to vector<8x8xf32>
    %145 = arith.addf %143, %144 : vector<8x8xf32>
    %cst_60 = arith.constant dense<0xFF800000> : vector<8xf32>
    %146 = vector.multi_reduction <maximumf>, %145, %cst_60 [1] : vector<8x8xf32> to vector<8xf32>
    %147 = vector.shape_cast %146 : vector<8xf32> to vector<8x1xf32>
    %148 = vector.broadcast %147 : vector<8x1xf32> to vector<8x8xf32>
    %149 = arith.subf %145, %148 : vector<8x8xf32>
    %150 = math.exp %149 : vector<8x8xf32>
    %cst_61 = arith.constant dense<0.000000e+00> : vector<8xf32>
    %151 = vector.multi_reduction <add>, %150, %cst_61 [1] : vector<8x8xf32> to vector<8xf32>
    %152 = vector.shape_cast %151 : vector<8xf32> to vector<8x1xf32>
    %153 = tpu.reciprocal %152 {approx = true} : vector<8x1xf32> -> vector<8x1xf32>
    %154 = vector.broadcast %153 : vector<8x1xf32> to vector<8x8xf32>
    %155 = arith.mulf %150, %154 : vector<8x8xf32>
    %cst_62 = arith.constant dense<0.000000e+00> : vector<8x8xf32>
    %156 = tpu.matmul %155, %142, %cst_62 {dimension_numbers = #tpu.dot_dimension_numbers<[1], [0], [0], [1], [0, 0, 1, 1], [], []>} : vector<8x8xf32>, vector<8x8xf32>, vector<8x8xf32> -> vector<8x8xf32>
    %c8_63 = arith.constant 8 : index
    %c16_64 = arith.constant 16 : index
    %157 = vector.load %arg26[%c8_63, %c16_64] : memref<16x32xf32, #tpu.memory_space<vmem>>, vector<8x8xf32>
    tpu.vector_store %arg26[%c8_63, %c16_64], %156 {strides = array<i32>} : memref<16x32xf32, #tpu.memory_space<vmem>>, vector<8x8xf32>,
    %158 = vector.extract_strided_slice %15 {offsets = [8, 24], sizes = [8, 8], strides = [1, 1]} : vector<16x32xf32> to vector<8x8xf32>
    %159 = vector.extract_strided_slice %22 {offsets = [8, 24], sizes = [8, 8], strides = [1, 1]} : vector<16x32xf32> to vector<8x8xf32>
    %160 = vector.extract_strided_slice %29 {offsets = [8, 24], sizes = [8, 8], strides = [1, 1]} : vector<16x32xf32> to vector<8x8xf32>
    %cst_65 = arith.constant dense<0.000000e+00> : vector<8x8xf32>
    %161 = tpu.matmul %158, %159, %cst_65 {dimension_numbers = #tpu.dot_dimension_numbers<[1], [1], [0], [0], [0, 0, 1, 0], [], []>} : vector<8x8xf32>, vector<8x8xf32>, vector<8x8xf32> -> vector<8x8xf32>
    %162 = vector.broadcast %103 : vector<1x8xf32> to vector<8x8xf32>
    %163 = arith.addf %161, %162 : vector<8x8xf32>
    %cst_66 = arith.constant dense<0xFF800000> : vector<8xf32>
    %164 = vector.multi_reduction <maximumf>, %163, %cst_66 [1] : vector<8x8xf32> to vector<8xf32>
    %165 = vector.shape_cast %164 : vector<8xf32> to vector<8x1xf32>
    %166 = vector.broadcast %165 : vector<8x1xf32> to vector<8x8xf32>
    %167 = arith.subf %163, %166 : vector<8x8xf32>
    %168 = math.exp %167 : vector<8x8xf32>
    %cst_67 = arith.constant dense<0.000000e+00> : vector<8xf32>
    %169 = vector.multi_reduction <add>, %168, %cst_67 [1] : vector<8x8xf32> to vector<8xf32>
    %170 = vector.shape_cast %169 : vector<8xf32> to vector<8x1xf32>
    %171 = tpu.reciprocal %170 {approx = true} : vector<8x1xf32> -> vector<8x1xf32>
    %172 = vector.broadcast %171 : vector<8x1xf32> to vector<8x8xf32>
    %173 = arith.mulf %168, %172 : vector<8x8xf32>
    %cst_68 = arith.constant dense<0.000000e+00> : vector<8x8xf32>
    %174 = tpu.matmul %173, %160, %cst_68 {dimension_numbers = #tpu.dot_dimension_numbers<[1], [0], [0], [1], [0, 0, 1, 1], [], []>} : vector<8x8xf32>, vector<8x8xf32>, vector<8x8xf32> -> vector<8x8xf32>
    %c8_69 = arith.constant 8 : index
    %c24_70 = arith.constant 24 : index
    %175 = vector.load %arg26[%c8_69, %c24_70] : memref<16x32xf32, #tpu.memory_space<vmem>>, vector<8x8xf32>
    tpu.vector_store %arg26[%c8_69, %c24_70], %174 {strides = array<i32>} : memref<16x32xf32, #tpu.memory_space<vmem>>, vector<8x8xf32>,
    %c0_71 = arith.constant 0 : index
    %c0_72 = arith.constant 0 : index
    %176 = vector.load %arg26[%c0_71, %c0_72] : memref<16x32xf32, #tpu.memory_space<vmem>>, vector<16x32xf32>
    %c0_73 = arith.constant 0 : index
    %c0_74 = arith.constant 0 : index
    %c0_75 = arith.constant 0 : index
    %177 = vector.load %arg12[%c0_73, %c0_74, %c0_75] : memref<1x32x32xf32, #tpu.memory_space<vmem>>, vector<1x32x32xf32>
    %178 = vector.shape_cast %177 : vector<1x32x32xf32> to vector<32x32xf32>
    %cst_76 = arith.constant dense<0.000000e+00> : vector<16x32xf32>
    %179 = tpu.matmul %176, %178, %cst_76 {dimension_numbers = #tpu.dot_dimension_numbers<[1], [0], [0], [1], [0, 0, 1, 1], [], []>} : vector<16x32xf32>, vector<32x32xf32>, vector<16x32xf32> -> vector<16x32xf32>
    %c0_77 = arith.constant 0 : index
    %c0_78 = arith.constant 0 : index
    %c0_79 = arith.constant 0 : index
    %180 = vector.load %arg13[%c0_77, %c0_78, %c0_79] : memref<1x1x32xf32, #tpu.memory_space<vmem>>, vector<1x1x32xf32>
    %181 = vector.shape_cast %180 : vector<1x1x32xf32> to vector<1x32xf32>
    %182 = vector.broadcast %181 : vector<1x32xf32> to vector<16x32xf32>
    %183 = arith.addf %179, %182 : vector<16x32xf32>
    %184 = arith.addf %3, %183 : vector<16x32xf32>
    %c0_80 = arith.constant 0 : index
    %c0_81 = arith.constant 0 : index
    %c0_82 = arith.constant 0 : index
    %185 = vector.load %arg14[%c0_80, %c0_81, %c0_82] : memref<1x1x32xf32, #tpu.memory_space<vmem>>, vector<1x1x32xf32>
    %186 = vector.shape_cast %185 : vector<1x1x32xf32> to vector<1x32xf32>
    %c0_83 = arith.constant 0 : index
    %c0_84 = arith.constant 0 : index
    %c0_85 = arith.constant 0 : index
    %187 = vector.load %arg15[%c0_83, %c0_84, %c0_85] : memref<1x1x32xf32, #tpu.memory_space<vmem>>, vector<1x1x32xf32>
    %188 = vector.shape_cast %187 : vector<1x1x32xf32> to vector<1x32xf32>
    %cst_86 = arith.constant dense<0.000000e+00> : vector<16xf32>
    %189 = vector.multi_reduction <add>, %184, %cst_86 [1] : vector<16x32xf32> to vector<16xf32>
    %190 = vector.shape_cast %189 : vector<16xf32> to vector<16x1xf32>
    %191 = arith.mulf %184, %184 : vector<16x32xf32>
    %cst_87 = arith.constant dense<0.000000e+00> : vector<16xf32>
    %192 = vector.multi_reduction <add>, %191, %cst_87 [1] : vector<16x32xf32> to vector<16xf32>
    %193 = vector.shape_cast %192 : vector<16xf32> to vector<16x1xf32>
    %cst_88 = arith.constant 3.125000e-02 : f32
    %194 = vector.broadcast %cst_88 : f32 to vector<16x1xf32>
    %195 = arith.mulf %190, %194 : vector<16x1xf32>
    %cst_89 = arith.constant 3.125000e-02 : f32
    %196 = vector.broadcast %cst_89 : f32 to vector<16x1xf32>
    %197 = arith.mulf %193, %196 : vector<16x1xf32>
    %198 = arith.mulf %195, %195 : vector<16x1xf32>
    %199 = arith.subf %197, %198 : vector<16x1xf32>
    %200 = vector.broadcast %195 : vector<16x1xf32> to vector<16x32xf32>
    %201 = arith.subf %184, %200 : vector<16x32xf32>
    %cst_90 = arith.constant 9.99999996E-13 : f32
    %202 = vector.broadcast %cst_90 : f32 to vector<16x1xf32>
    %203 = arith.addf %199, %202 : vector<16x1xf32>
    %204 = math.rsqrt %203 : vector<16x1xf32>
    %205 = vector.broadcast %204 : vector<16x1xf32> to vector<16x32xf32>
    %206 = arith.mulf %201, %205 : vector<16x32xf32>
    %207 = vector.broadcast %186 : vector<1x32xf32> to vector<16x32xf32>
    %208 = arith.mulf %206, %207 : vector<16x32xf32>
    %209 = vector.broadcast %188 : vector<1x32xf32> to vector<16x32xf32>
    %210 = arith.addf %208, %209 : vector<16x32xf32>
    %c0_91 = arith.constant 0 : index
    %c0_92 = arith.constant 0 : index
    %c0_93 = arith.constant 0 : index
    %211 = vector.load %arg16[%c0_91, %c0_92, %c0_93] : memref<1x32x64xf32, #tpu.memory_space<vmem>>, vector<1x32x64xf32>
    %212 = vector.shape_cast %211 : vector<1x32x64xf32> to vector<32x64xf32>
    %cst_94 = arith.constant dense<0.000000e+00> : vector<16x64xf32>
    %213 = tpu.matmul %210, %212, %cst_94 {dimension_numbers = #tpu.dot_dimension_numbers<[1], [0], [0], [1], [0, 0, 1, 1], [], []>} : vector<16x32xf32>, vector<32x64xf32>, vector<16x64xf32> -> vector<16x64xf32>
    %c0_95 = arith.constant 0 : index
    %c0_96 = arith.constant 0 : index
    %c0_97 = arith.constant 0 : index
    %214 = vector.load %arg17[%c0_95, %c0_96, %c0_97] : memref<1x1x64xf32, #tpu.memory_space<vmem>>, vector<1x1x64xf32>
    %215 = vector.shape_cast %214 : vector<1x1x64xf32> to vector<1x64xf32>
    %216 = vector.broadcast %215 : vector<1x64xf32> to vector<16x64xf32>
    %217 = arith.addf %213, %216 : vector<16x64xf32>
    %218 = arith.mulf %217, %217 : vector<16x64xf32>
    %219 = arith.mulf %217, %218 : vector<16x64xf32>
    %cst_98 = arith.constant 4.471500e-02 : f32
    %220 = vector.broadcast %cst_98 : f32 to vector<16x64xf32>
    %221 = arith.mulf %220, %219 : vector<16x64xf32>
    %222 = arith.addf %217, %221 : vector<16x64xf32>
    %cst_99 = arith.constant 0.797884583 : f32
    %223 = vector.broadcast %cst_99 : f32 to vector<16x64xf32>
    %224 = arith.mulf %223, %222 : vector<16x64xf32>
    %225 = math.tanh %224 : vector<16x64xf32>
    %cst_100 = arith.constant 1.000000e+00 : f32
    %226 = vector.broadcast %cst_100 : f32 to vector<16x64xf32>
    %227 = arith.addf %226, %225 : vector<16x64xf32>
    %cst_101 = arith.constant 5.000000e-01 : f32
    %228 = vector.broadcast %cst_101 : f32 to vector<16x64xf32>
    %229 = arith.mulf %228, %227 : vector<16x64xf32>
    %230 = arith.mulf %217, %229 : vector<16x64xf32>
    %c0_102 = arith.constant 0 : index
    %c0_103 = arith.constant 0 : index
    %c0_104 = arith.constant 0 : index
    %231 = vector.load %arg18[%c0_102, %c0_103, %c0_104] : memref<1x64x32xf32, #tpu.memory_space<vmem>>, vector<1x64x32xf32>
    %232 = vector.shape_cast %231 : vector<1x64x32xf32> to vector<64x32xf32>
    %cst_105 = arith.constant dense<0.000000e+00> : vector<16x32xf32>
    %233 = tpu.matmul %230, %232, %cst_105 {dimension_numbers = #tpu.dot_dimension_numbers<[1], [0], [0], [1], [0, 0, 1, 1], [], []>} : vector<16x64xf32>, vector<64x32xf32>, vector<16x32xf32> -> vector<16x32xf32>
    %c0_106 = arith.constant 0 : index
    %c0_107 = arith.constant 0 : index
    %c0_108 = arith.constant 0 : index
    %234 = vector.load %arg19[%c0_106, %c0_107, %c0_108] : memref<1x1x32xf32, #tpu.memory_space<vmem>>, vector<1x1x32xf32>
    %235 = vector.shape_cast %234 : vector<1x1x32xf32> to vector<1x32xf32>
    %236 = vector.broadcast %235 : vector<1x32xf32> to vector<16x32xf32>
    %237 = arith.addf %233, %236 : vector<16x32xf32>
    %238 = arith.addf %210, %237 : vector<16x32xf32>
    %c0_109 = arith.constant 0 : index
    %c0_110 = arith.constant 0 : index
    %c0_111 = arith.constant 0 : index
    %239 = vector.load %arg20[%c0_109, %c0_110, %c0_111] : memref<1x1x32xf32, #tpu.memory_space<vmem>>, vector<1x1x32xf32>
    %240 = vector.shape_cast %239 : vector<1x1x32xf32> to vector<1x32xf32>
    %c0_112 = arith.constant 0 : index
    %c0_113 = arith.constant 0 : index
    %c0_114 = arith.constant 0 : index
    %241 = vector.load %arg21[%c0_112, %c0_113, %c0_114] : memref<1x1x32xf32, #tpu.memory_space<vmem>>, vector<1x1x32xf32>
    %242 = vector.shape_cast %241 : vector<1x1x32xf32> to vector<1x32xf32>
    %cst_115 = arith.constant dense<0.000000e+00> : vector<16xf32>
    %243 = vector.multi_reduction <add>, %238, %cst_115 [1] : vector<16x32xf32> to vector<16xf32>
    %244 = vector.shape_cast %243 : vector<16xf32> to vector<16x1xf32>
    %245 = arith.mulf %238, %238 : vector<16x32xf32>
    %cst_116 = arith.constant dense<0.000000e+00> : vector<16xf32>
    %246 = vector.multi_reduction <add>, %245, %cst_116 [1] : vector<16x32xf32> to vector<16xf32>
    %247 = vector.shape_cast %246 : vector<16xf32> to vector<16x1xf32>
    %cst_117 = arith.constant 3.125000e-02 : f32
    %248 = vector.broadcast %cst_117 : f32 to vector<16x1xf32>
    %249 = arith.mulf %244, %248 : vector<16x1xf32>
    %cst_118 = arith.constant 3.125000e-02 : f32
    %250 = vector.broadcast %cst_118 : f32 to vector<16x1xf32>
    %251 = arith.mulf %247, %250 : vector<16x1xf32>
    %252 = arith.mulf %249, %249 : vector<16x1xf32>
    %253 = arith.subf %251, %252 : vector<16x1xf32>
    %254 = vector.broadcast %249 : vector<16x1xf32> to vector<16x32xf32>
    %255 = arith.subf %238, %254 : vector<16x32xf32>
    %cst_119 = arith.constant 9.99999996E-13 : f32
    %256 = vector.broadcast %cst_119 : f32 to vector<16x1xf32>
    %257 = arith.addf %253, %256 : vector<16x1xf32>
    %258 = math.rsqrt %257 : vector<16x1xf32>
    %259 = vector.broadcast %258 : vector<16x1xf32> to vector<16x32xf32>
    %260 = arith.mulf %255, %259 : vector<16x32xf32>
    %261 = vector.broadcast %240 : vector<1x32xf32> to vector<16x32xf32>
    %262 = arith.mulf %260, %261 : vector<16x32xf32>
    %263 = vector.broadcast %242 : vector<1x32xf32> to vector<16x32xf32>
    %264 = arith.addf %262, %263 : vector<16x32xf32>
    %c0_120 = arith.constant 0 : index
    %c0_121 = arith.constant 0 : index
    %265 = vector.load %arg25[%c0_120, %c0_121] : memref<16x32xf32, #tpu.memory_space<vmem>>, vector<16x32xf32>
    tpu.vector_store %arg25[%c0_120, %c0_121], %264 {strides = array<i32>} : memref<16x32xf32, #tpu.memory_space<vmem>>, vector<16x32xf32>,
    %c1_i32 = arith.constant 1 : i32
    %266 = arith.cmpi eq, %arg0, %c1_i32 : i32
    %267 = arith.extui %266 : i1 to i32
    %c0_i32_122 = arith.constant 0 : i32
    %268 = arith.cmpi ne, %267, %c0_i32_122 : i32
    scf.if %268 {
      %269 = vector.extract_strided_slice %264 {offsets = [0, 0], sizes = [1, 32], strides = [1, 1]} : vector<16x32xf32> to vector<1x32xf32>
      %270 = vector.extract_strided_slice %264 {offsets = [8, 0], sizes = [1, 32], strides = [1, 1]} : vector<16x32xf32> to vector<1x32xf32>
      %271 = tpu.concatenate %269, %270 in 0 : vector<1x32xf32>, vector<1x32xf32> -> vector<2x32xf32>
      %c0_123 = arith.constant 0 : index
      %c0_124 = arith.constant 0 : index
      %272 = vector.load %arg22[%c0_123, %c0_124] : memref<32x128xf32, #tpu.memory_space<vmem>>, vector<32x128xf32>
      %cst_125 = arith.constant dense<0.000000e+00> : vector<2x128xf32>
      %273 = tpu.matmul %271, %272, %cst_125 {dimension_numbers = #tpu.dot_dimension_numbers<[1], [0], [0], [1], [0, 0, 1, 1], [], []>} : vector<2x32xf32>, vector<32x128xf32>, vector<2x128xf32> -> vector<2x128xf32>
      %c0_126 = arith.constant 0 : index
      %c0_127 = arith.constant 0 : index
      %274 = vector.load %arg23[%c0_126, %c0_127] : memref<1x128xf32, #tpu.memory_space<vmem>>, vector<1x128xf32>
      %275 = vector.broadcast %274 : vector<1x128xf32> to vector<2x128xf32>
      %276 = arith.addf %273, %275 : vector<2x128xf32>
      %c0_128 = arith.constant 0 : index
      %c0_129 = arith.constant 0 : index
      %277 = vector.load %arg24[%c0_128, %c0_129] : memref<2x128xf32, #tpu.memory_space<vmem>>, vector<2x128xf32>
      tpu.vector_store %arg24[%c0_128, %c0_129], %276 {strides = array<i32>} : memref<2x128xf32, #tpu.memory_space<vmem>>, vector<2x128xf32>,
    } else {
    }
    return
  }
  func.func @transform_0(%arg0: i32) -> (i32, i32) {
    %c0_i32 = arith.constant 0 : i32
    %c0_i32_0 = arith.constant 0 : i32
    %c0_i32_1 = arith.constant 0 : i32
    return %c0_i32, %c0_i32_0 : i32, i32
  }
  func.func @transform_1(%arg0: i32) -> (i32, i32) {
    %c0_i32 = arith.constant 0 : i32
    %c0_i32_0 = arith.constant 0 : i32
    %c0_i32_1 = arith.constant 0 : i32
    return %c0_i32, %c0_i32_0 : i32, i32
  }
  func.func @transform_2(%arg0: i32) -> (i32, i32) {
    %c0_i32 = arith.constant 0 : i32
    %c0_i32_0 = arith.constant 0 : i32
    %c0_i32_1 = arith.constant 0 : i32
    return %c0_i32, %c0_i32_0 : i32, i32
  }
  func.func @transform_3(%arg0: i32) -> (i32, i32) {
    %c0_i32 = arith.constant 0 : i32
    %c0_i32_0 = arith.constant 0 : i32
    %c0_i32_1 = arith.constant 0 : i32
    return %c0_i32, %c0_i32_0 : i32, i32
  }
  func.func @transform_4(%arg0: i32) -> (i32, i32) {
    %c0_i32 = arith.constant 0 : i32
    %c0_i32_0 = arith.constant 0 : i32
    %c0_i32_1 = arith.constant 0 : i32
    return %c0_i32, %c0_i32_0 : i32, i32
  }
  func.func @transform_5(%arg0: i32) -> (i32, i32, i32) {
    %c0_i32 = arith.constant 0 : i32
    %c0_i32_0 = arith.constant 0 : i32
    %c0_i32_1 = arith.constant 0 : i32
    return %arg0, %c0_i32, %c0_i32_0 : i32, i32, i32
  }
  func.func @transform_6(%arg0: i32) -> (i32, i32, i32) {
    %c0_i32 = arith.constant 0 : i32
    %c0_i32_0 = arith.constant 0 : i32
    %c0_i32_1 = arith.constant 0 : i32
    return %arg0, %c0_i32, %c0_i32_0 : i32, i32, i32
  }
  func.func @transform_7(%arg0: i32) -> (i32, i32, i32) {
    %c0_i32 = arith.constant 0 : i32
    %c0_i32_0 = arith.constant 0 : i32
    %c0_i32_1 = arith.constant 0 : i32
    return %arg0, %c0_i32, %c0_i32_0 : i32, i32, i32
  }
  func.func @transform_8(%arg0: i32) -> (i32, i32, i32) {
    %c0_i32 = arith.constant 0 : i32
    %c0_i32_0 = arith.constant 0 : i32
    %c0_i32_1 = arith.constant 0 : i32
    return %arg0, %c0_i32, %c0_i32_0 : i32, i32, i32
  }
  func.func @transform_9(%arg0: i32) -> (i32, i32, i32) {
    %c0_i32 = arith.constant 0 : i32
    %c0_i32_0 = arith.constant 0 : i32
    %c0_i32_1 = arith.constant 0 : i32
    return %arg0, %c0_i32, %c0_i32_0 : i32, i32, i32
  }
  func.func @transform_10(%arg0: i32) -> (i32, i32, i32) {
    %c0_i32 = arith.constant 0 : i32
    %c0_i32_0 = arith.constant 0 : i32
    %c0_i32_1 = arith.constant 0 : i32
    return %arg0, %c0_i32, %c0_i32_0 : i32, i32, i32
  }
  func.func @transform_11(%arg0: i32) -> (i32, i32, i32) {
    %c0_i32 = arith.constant 0 : i32
    %c0_i32_0 = arith.constant 0 : i32
    %c0_i32_1 = arith.constant 0 : i32
    return %arg0, %c0_i32, %c0_i32_0 : i32, i32, i32
  }
  func.func @transform_12(%arg0: i32) -> (i32, i32, i32) {
    %c0_i32 = arith.constant 0 : i32
    %c0_i32_0 = arith.constant 0 : i32
    %c0_i32_1 = arith.constant 0 : i32
    return %arg0, %c0_i32, %c0_i32_0 : i32, i32, i32
  }
  func.func @transform_13(%arg0: i32) -> (i32, i32, i32) {
    %c0_i32 = arith.constant 0 : i32
    %c0_i32_0 = arith.constant 0 : i32
    %c0_i32_1 = arith.constant 0 : i32
    return %arg0, %c0_i32, %c0_i32_0 : i32, i32, i32
  }
  func.func @transform_14(%arg0: i32) -> (i32, i32, i32) {
    %c0_i32 = arith.constant 0 : i32
    %c0_i32_0 = arith.constant 0 : i32
    %c0_i32_1 = arith.constant 0 : i32
    return %arg0, %c0_i32, %c0_i32_0 : i32, i32, i32
  }
  func.func @transform_15(%arg0: i32) -> (i32, i32, i32) {
    %c0_i32 = arith.constant 0 : i32
    %c0_i32_0 = arith.constant 0 : i32
    %c0_i32_1 = arith.constant 0 : i32
    return %arg0, %c0_i32, %c0_i32_0 : i32, i32, i32
  }
  func.func @transform_16(%arg0: i32) -> (i32, i32, i32) {
    %c0_i32 = arith.constant 0 : i32
    %c0_i32_0 = arith.constant 0 : i32
    %c0_i32_1 = arith.constant 0 : i32
    return %arg0, %c0_i32, %c0_i32_0 : i32, i32, i32
  }
  func.func @transform_17(%arg0: i32) -> (i32, i32, i32) {
    %c0_i32 = arith.constant 0 : i32
    %c0_i32_0 = arith.constant 0 : i32
    %c0_i32_1 = arith.constant 0 : i32
    return %arg0, %c0_i32, %c0_i32_0 : i32, i32, i32
  }
  func.func @transform_18(%arg0: i32) -> (i32, i32, i32) {
    %c0_i32 = arith.constant 0 : i32
    %c0_i32_0 = arith.constant 0 : i32
    %c0_i32_1 = arith.constant 0 : i32
    return %arg0, %c0_i32, %c0_i32_0 : i32, i32, i32
  }
  func.func @transform_19(%arg0: i32) -> (i32, i32, i32) {
    %c0_i32 = arith.constant 0 : i32
    %c0_i32_0 = arith.constant 0 : i32
    %c0_i32_1 = arith.constant 0 : i32
    return %arg0, %c0_i32, %c0_i32_0 : i32, i32, i32
  }
  func.func @transform_20(%arg0: i32) -> (i32, i32, i32) {
    %c0_i32 = arith.constant 0 : i32
    %c0_i32_0 = arith.constant 0 : i32
    %c0_i32_1 = arith.constant 0 : i32
    return %arg0, %c0_i32, %c0_i32_0 : i32, i32, i32
  }
  func.func @transform_21(%arg0: i32) -> (i32, i32) {
    %c0_i32 = arith.constant 0 : i32
    %c0_i32_0 = arith.constant 0 : i32
    %c0_i32_1 = arith.constant 0 : i32
    return %c0_i32, %c0_i32_0 : i32, i32
  }
  func.func @transform_22(%arg0: i32) -> (i32, i32) {
    %c0_i32 = arith.constant 0 : i32
    %c0_i32_0 = arith.constant 0 : i32
    %c0_i32_1 = arith.constant 0 : i32
    return %c0_i32, %c0_i32_0 : i32, i32
  }
  func.func @transform_23(%arg0: i32) -> (i32, i32) {
    %c0_i32 = arith.constant 0 : i32
    %c0_i32_0 = arith.constant 0 : i32
    %c0_i32_1 = arith.constant 0 : i32
    return %c0_i32, %c0_i32_0 : i32, i32
  }
}

</mosaic_0001>

<llo_original>
// kernel: tpu_custom_call.1
$region0: #{tpu_custom_call.1}
  #allocation0 [shape = 'u32[]', space=smem, size = 0x4, offset = 0x4, fixed_abs, tag = 'smem constant byte address 0x4 - core index']
  #allocation1 [shape = 'u32[72,128]{1,0:T(1,128)}', space=vmem, size = 0x9000, scoped, tag = 'internal scratch']
  #allocation2 [shape = 'f32[16,32]{1,0:T(8,128)}', space=vmem, size = 0x2000, scoped, tag = 'scratch operand']
  #allocation3 [shape = 'f32[16,32]{1,0:T(8,128)}', space=vmem, size = 0x2000, scoped, tag = 'scratch operand']
  %s0 = inlined_call_operand.hbm [shape: f32[16,32], index: 0, kind: input, shape index: {}]
  %s1 = inlined_call_operand.hbm [shape: f32[16,32], index: 1, kind: input, shape index: {}]
  %s2 = inlined_call_operand.hbm [shape: f32[2,8], index: 2, kind: input, shape index: {}]
  %s3 = inlined_call_operand.hbm [shape: f32[1,32], index: 3, kind: input, shape index: {}]
  %s4 = inlined_call_operand.hbm [shape: f32[1,32], index: 4, kind: input, shape index: {}]
  %s5 = inlined_call_operand.vmem [shape: f32[2,32,32], index: 5, kind: input, shape index: {}]
  %s6 = inlined_call_operand.vmem [shape: f32[2,1,32], index: 6, kind: input, shape index: {}]
  %s7 = inlined_call_operand.vmem [shape: f32[2,32,32], index: 7, kind: input, shape index: {}]
  %s8 = inlined_call_operand.vmem [shape: f32[2,1,32], index: 8, kind: input, shape index: {}]
  %s9 = inlined_call_operand.vmem [shape: f32[2,32,32], index: 9, kind: input, shape index: {}]
  %s10 = inlined_call_operand.vmem [shape: f32[2,1,32], index: 10, kind: input, shape index: {}]
  %s11 = inlined_call_operand.hbm [shape: f32[2,32,32], index: 11, kind: input, shape index: {}]
  %s12 = inlined_call_operand.vmem [shape: f32[2,1,32], index: 12, kind: input, shape index: {}]
  %s13 = inlined_call_operand.vmem [shape: f32[2,1,32], index: 13, kind: input, shape index: {}]
  %s14 = inlined_call_operand.hbm [shape: f32[2,1,32], index: 14, kind: input, shape index: {}]
  %s15 = inlined_call_operand.hbm [shape: f32[2,32,64], index: 15, kind: input, shape index: {}]
  %s16 = inlined_call_operand.vmem [shape: f32[2,1,64], index: 16, kind: input, shape index: {}]
  %s17 = inlined_call_operand.vmem [shape: f32[2,64,32], index: 17, kind: input, shape index: {}]
  %s18 = inlined_call_operand.vmem [shape: f32[2,1,32], index: 18, kind: input, shape index: {}]
  %s19 = inlined_call_operand.vmem [shape: f32[2,1,32], index: 19, kind: input, shape index: {}]
  %s20 = inlined_call_operand.hbm [shape: f32[2,1,32], index: 20, kind: input, shape index: {}]
  %s21 = inlined_call_operand.hbm [shape: f32[32,128], index: 21, kind: input, shape index: {}]
  %s22 = inlined_call_operand.vmem [shape: f32[1,128], index: 22, kind: input, shape index: {}]
  %s23 = inlined_call_operand.hbm [shape: f32[2,128], index: 23, kind: output, shape index: {}]
  %s24 = sld [smem:[#allocation0]]
  $region173: #{tpu_custom_call.1} parent=0
    _
  %s26 = ssub.s32 1, %s24
  %s27 = scalar_select 0, %s26, %s24
  $region1: #{tpu_custom_call.1} parent=0
    #allocation4 [shape = 'u8[8192]{0}', space=vmem, size = 0x2000, scoped, tag = 'input window, operand 0, single buffered']
    #allocation5 [shape = 's32[2]{0}', space=sflag, size = 0x8, scoped, tag = 'scoped memory for tpu_custom_call.1']
    #allocation6 [shape = 's32[2]{0}', space=sflag, size = 0x8, scoped, tag = 'scoped memory for tpu_custom_call.1']
    #allocation7 [shape = 'u8[8192]{0}', space=vmem, size = 0x2000, scoped, tag = 'input window, operand 1, single buffered']
    #allocation8 [shape = 's32[1]{0}', space=sflag, size = 0x4, scoped, tag = 'scoped memory for tpu_custom_call.1']
    #allocation9 [shape = 'u8[1024]{0}', space=vmem, size = 0x400, scoped, tag = 'input window, operand 2, single buffered']
    #allocation10 [shape = 'u8[512]{0}', space=vmem, size = 0x400, scoped, tag = 'input window, operand 3, single buffered']
    #allocation11 [shape = 's32[1]{0}', space=sflag, size = 0x4, scoped, tag = 'scoped memory for tpu_custom_call.1']
    #allocation12 [shape = 'u8[512]{0}', space=vmem, size = 0x400, scoped, tag = 'input window, operand 4, single buffered']
    #allocation13 [shape = 'u8[32768]{0}', space=vmem, size = 0x8000, scoped, tag = 'input window, operand 11']
    #allocation14 [shape = 's32[2]{0}', space=sflag, size = 0x8, scoped, tag = 'scoped memory for tpu_custom_call.1']
    #allocation15 [shape = 'u8[1024]{0}', space=vmem, size = 0x400, scoped, tag = 'input window, operand 14']
    #allocation16 [shape = 'u8[32768]{0}', space=vmem, size = 0x8000, scoped, tag = 'input window, operand 15']
    #allocation17 [shape = 's32[2]{0}', space=sflag, size = 0x8, scoped, tag = 'scoped memory for tpu_custom_call.1']
    #allocation18 [shape = 'u8[1024]{0}', space=vmem, size = 0x400, scoped, tag = 'input window, operand 20']
    #allocation19 [shape = 'u8[16384]{0}', space=vmem, size = 0x4000, scoped, tag = 'input window, operand 21, single buffered']
    #allocation20 [shape = 's32[1]{0}', space=sflag, size = 0x4, scoped, tag = 'scoped memory for tpu_custom_call.1']
    #allocation21 [shape = 'u8[1024]{0}', space=vmem, size = 0x400, scoped, tag = 'output window, operand 0, single buffered']
    %28 = vsyncpa [#allocation5], 0
    %29 = vsyncpa [#allocation8], 0
    %30 = vsyncpa [#allocation11], 0
    %31 = vsyncpa [#allocation14], 0
    %s32 = scalar_lea.sflag [#allocation14], 1
    %33 = vsyncpa %s32, 0
    %34 = vsyncpa [#allocation17], 0
    %s35 = scalar_lea.sflag [#allocation17], 1
    %36 = vsyncpa %s35, 0
    %37 = vsyncpa [#allocation20], 0
    %38 = vsyncpa [#allocation6], 0
    loop: start=0, step=1, limit=4
    $region2: #{tpu_custom_call.1} parent=1 // loop_pre_header
      _
    $region3: #{tpu_custom_call.1} parent=1 // loop_header
      %s40 = sphi 0, %s44
      %p41 = scmp.ge.s32.totalorder %s40, 4
      %s48 = sphi 0, %s48
      %s50 = sphi 0, %s48
      %s51 = sphi 0, %s50
      %s65 = sphi 0, %s51
      %s69 = sphi 0, %s69
      %s71 = sphi 0, %s69
      %s72 = sphi 0, %s71
      %s86 = sphi 0, %s72
      %s90 = sphi 0, %s90
      %s92 = sphi 0, %s90
      %s93 = sphi 0, %s92
      %s107 = sphi 0, %s93
      %s111 = sphi 0, %s111
      %s113 = sphi 0, %s111
      %s114 = sphi 0, %s113
      %s128 = sphi 0, %s114
      %s132 = sphi 0, %s132
      %s134 = sphi 0, %s132
      %s135 = sphi 0, %s134
      %s149 = sphi 0, %s135
      %s155 = sphi 0, %s157
      %s158 = sphi 0, %s155
      %s159 = sphi 0, %s158
      %s175 = sphi 0, %s159
      %s181 = sphi 0, %s183
      %s184 = sphi 0, %s181
      %s185 = sphi 0, %s184
      %s201 = sphi 0, %s185
      %s207 = sphi 0, %s209
      %s210 = sphi 0, %s207
      %s211 = sphi 0, %s210
      %s227 = sphi 0, %s211
      %s233 = sphi 0, %s235
      %s236 = sphi 0, %s233
      %s237 = sphi 0, %s236
      %s253 = sphi 0, %s237
      %s259 = sphi 0, %s261
      %s262 = sphi 0, %s259
      %s263 = sphi 0, %s262
      %s279 = sphi 0, %s263
      %s285 = sphi 0, %s287
      %s288 = sphi 0, %s285
      %s289 = sphi 0, %s288
      %s305 = sphi 0, %s289
      %s311 = sphi 0, %s313
      %s314 = sphi 0, %s311
      %s315 = sphi 0, %s314
      %s331 = sphi 0, %s315
      %s337 = sphi 0, %s339
      %s340 = sphi 0, %s337
      %s341 = sphi 0, %s340
      %s357 = sphi 0, %s341
      %s363 = sphi 0, %s365
      %s366 = sphi 0, %s363
      %s367 = sphi 0, %s366
      %s383 = sphi 0, %s367
      %s389 = sphi 0, %s391
      %s392 = sphi 0, %s389
      %s393 = sphi 0, %s392
      %s409 = sphi 0, %s393
      %s415 = sphi 0, %s417
      %s418 = sphi 0, %s415
      %s419 = sphi 0, %s418
      %s435 = sphi 0, %s419
      %s441 = sphi 0, %s443
      %s444 = sphi 0, %s441
      %s445 = sphi 0, %s444
      %s461 = sphi 0, %s445
      %s467 = sphi 0, %s469
      %s470 = sphi 0, %s467
      %s471 = sphi 0, %s470
      %s487 = sphi 0, %s471
      %s493 = sphi 0, %s495
      %s496 = sphi 0, %s493
      %s497 = sphi 0, %s496
      %s513 = sphi 0, %s497
      %s519 = sphi 0, %s521
      %s522 = sphi 0, %s519
      %s523 = sphi 0, %s522
      %s539 = sphi 0, %s523
      %s545 = sphi 0, %s547
      %s548 = sphi 0, %s545
      %s549 = sphi 0, %s548
      %s565 = sphi 0, %s549
      %s569 = sphi 0, %s569
      %s571 = sphi 0, %s569
      %s572 = sphi 0, %s571
      %s586 = sphi 0, %s572
      %s590 = sphi 0, %s590
      %s592 = sphi 0, %s590
      %s593 = sphi 0, %s592
      %s607 = sphi 0, %s593
      %s611 = sphi 0, %s611
      %s613 = sphi 0, %s611
      %s614 = sphi 0, %s613
      %s628 = sphi 0, %s614
    $region4: #{tpu_custom_call.1} parent=1 // loop_header_branch
      %43 = sbr.rel (%p41) target = $region8
    $region5: #{tpu_custom_call.1} parent=1 // loop_body
      %s45 = ssub.s32 %s40, 1
      %s46 = ssub.s32 %s40, 2
      %s47 = sadd.s32 %s40, 1
      %s49 = sadd.s32 %s48, 1
      %p52 = scmp.eq.s32.totalorder %s40, 1
      %p53 = scmp.ne.s32.totalorder %s48, %s50
      %p54 = scmp.eq.s32.totalorder %s40, 0
      %p55 = por %p53, %p54
      %p56 = scmp.ne.s32.totalorder %s48, %s50
      %p57 = scmp.eq.s32.totalorder %s45, 1
      %p58 = por %p56, %p57
      %p59 = scmp.ne.s32.totalorder %s50, %s51
      %p60 = scmp.eq.s32.totalorder %s45, 0
      %p61 = por %p59, %p60
      %p62 = scmp.ne.s32.totalorder %s50, %s51
      %p63 = scmp.eq.s32.totalorder %s46, 1
      %p64 = por %p62, %p63
      %p66 = scmp.ne.s32.totalorder %s51, %s65
      %p67 = scmp.eq.s32.totalorder %s46, 0
      %p68 = por %p66, %p67
      %s70 = sadd.s32 %s69, 1
      %p73 = scmp.eq.s32.totalorder %s40, 1
      %p74 = scmp.ne.s32.totalorder %s69, %s71
      %p75 = scmp.eq.s32.totalorder %s40, 0
      %p76 = por %p74, %p75
      %p77 = scmp.ne.s32.totalorder %s69, %s71
      %p78 = scmp.eq.s32.totalorder %s45, 1
      %p79 = por %p77, %p78
      %p80 = scmp.ne.s32.totalorder %s71, %s72
      %p81 = scmp.eq.s32.totalorder %s45, 0
      %p82 = por %p80, %p81
      %p83 = scmp.ne.s32.totalorder %s71, %s72
      %p84 = scmp.eq.s32.totalorder %s46, 1
      %p85 = por %p83, %p84
      %p87 = scmp.ne.s32.totalorder %s72, %s86
      %p88 = scmp.eq.s32.totalorder %s46, 0
      %p89 = por %p87, %p88
      %s91 = sadd.s32 %s90, 1
      %p94 = scmp.eq.s32.totalorder %s40, 1
      %p95 = scmp.ne.s32.totalorder %s90, %s92
      %p96 = scmp.eq.s32.totalorder %s40, 0
      %p97 = por %p95, %p96
      %p98 = scmp.ne.s32.totalorder %s90, %s92
      %p99 = scmp.eq.s32.totalorder %s45, 1
      %p100 = por %p98, %p99
      %p101 = scmp.ne.s32.totalorder %s92, %s93
      %p102 = scmp.eq.s32.totalorder %s45, 0
      %p103 = por %p101, %p102
      %p104 = scmp.ne.s32.totalorder %s92, %s93
      %p105 = scmp.eq.s32.totalorder %s46, 1
      %p106 = por %p104, %p105
      %p108 = scmp.ne.s32.totalorder %s93, %s107
      %p109 = scmp.eq.s32.totalorder %s46, 0
      %p110 = por %p108, %p109
      %s112 = sadd.s32 %s111, 1
      %p115 = scmp.eq.s32.totalorder %s40, 1
      %p116 = scmp.ne.s32.totalorder %s111, %s113
      %p117 = scmp.eq.s32.totalorder %s40, 0
      %p118 = por %p116, %p117
      %p119 = scmp.ne.s32.totalorder %s111, %s113
      %p120 = scmp.eq.s32.totalorder %s45, 1
      %p121 = por %p119, %p120
      %p122 = scmp.ne.s32.totalorder %s113, %s114
      %p123 = scmp.eq.s32.totalorder %s45, 0
      %p124 = por %p122, %p123
      %p125 = scmp.ne.s32.totalorder %s113, %s114
      %p126 = scmp.eq.s32.totalorder %s46, 1
      %p127 = por %p125, %p126
      %p129 = scmp.ne.s32.totalorder %s114, %s128
      %p130 = scmp.eq.s32.totalorder %s46, 0
      %p131 = por %p129, %p130
      %s133 = sadd.s32 %s132, 1
      %p136 = scmp.eq.s32.totalorder %s40, 1
      %p137 = scmp.ne.s32.totalorder %s132, %s134
      %p138 = scmp.eq.s32.totalorder %s40, 0
      %p139 = por %p137, %p138
      %p140 = scmp.ne.s32.totalorder %s132, %s134
      %p141 = scmp.eq.s32.totalorder %s45, 1
      %p142 = por %p140, %p141
      %p143 = scmp.ne.s32.totalorder %s134, %s135
      %p144 = scmp.eq.s32.totalorder %s45, 0
      %p145 = por %p143, %p144
      %p146 = scmp.ne.s32.totalorder %s134, %s135
      %p147 = scmp.eq.s32.totalorder %s46, 1
      %p148 = por %p146, %p147
      %p150 = scmp.ne.s32.totalorder %s135, %s149
      %p151 = scmp.eq.s32.totalorder %s46, 0
      %p152 = por %p150, %p151
      %s153 = ssub.s32 %s40, %s47
      %p154 = scmp.eq.s32.totalorder %s153, 0
      %s156 = sadd.s32 %s155, 1
      %s157 = scalar_select %p154, %s155, %s156
      %p160 = pneg %p154
      %p161 = scmp.eq.s32.totalorder %s40, 1
      %p162 = por %p160, %p161
      %p163 = scmp.ne.s32.totalorder %s155, %s158
      %p164 = scmp.eq.s32.totalorder %s40, 0
      %p165 = por %p163, %p164
      %p166 = scmp.ne.s32.totalorder %s155, %s158
      %p167 = scmp.eq.s32.totalorder %s45, 1
      %p168 = por %p166, %p167
      %p169 = scmp.ne.s32.totalorder %s158, %s159
      %p170 = scmp.eq.s32.totalorder %s45, 0
      %p171 = por %p169, %p170
      %p172 = scmp.ne.s32.totalorder %s158, %s159
      %p173 = scmp.eq.s32.totalorder %s46, 1
      %p174 = por %p172, %p173
      %p176 = scmp.ne.s32.totalorder %s159, %s175
      %p177 = scmp.eq.s32.totalorder %s46, 0
      %p178 = por %p176, %p177
      %s179 = ssub.s32 %s40, %s47
      %p180 = scmp.eq.s32.totalorder %s179, 0
      %s182 = sadd.s32 %s181, 1
      %s183 = scalar_select %p180, %s181, %s182
      %p186 = pneg %p180
      %p187 = scmp.eq.s32.totalorder %s40, 1
      %p188 = por %p186, %p187
      %p189 = scmp.ne.s32.totalorder %s181, %s184
      %p190 = scmp.eq.s32.totalorder %s40, 0
      %p191 = por %p189, %p190
      %p192 = scmp.ne.s32.totalorder %s181, %s184
      %p193 = scmp.eq.s32.totalorder %s45, 1
      %p194 = por %p192, %p193
      %p195 = scmp.ne.s32.totalorder %s184, %s185
      %p196 = scmp.eq.s32.totalorder %s45, 0
      %p197 = por %p195, %p196
      %p198 = scmp.ne.s32.totalorder %s184, %s185
      %p199 = scmp.eq.s32.totalorder %s46, 1
      %p200 = por %p198, %p199
      %p202 = scmp.ne.s32.totalorder %s185, %s201
      %p203 = scmp.eq.s32.totalorder %s46, 0
      %p204 = por %p202, %p203
      %s205 = ssub.s32 %s40, %s47
      %p206 = scmp.eq.s32.totalorder %s205, 0
      %s208 = sadd.s32 %s207, 1
      %s209 = scalar_select %p206, %s207, %s208
      %p212 = pneg %p206
      %p213 = scmp.eq.s32.totalorder %s40, 1
      %p214 = por %p212, %p213
      %p215 = scmp.ne.s32.totalorder %s207, %s210
      %p216 = scmp.eq.s32.totalorder %s40, 0
      %p217 = por %p215, %p216
      %p218 = scmp.ne.s32.totalorder %s207, %s210
      %p219 = scmp.eq.s32.totalorder %s45, 1
      %p220 = por %p218, %p219
      %p221 = scmp.ne.s32.totalorder %s210, %s211
      %p222 = scmp.eq.s32.totalorder %s45, 0
      %p223 = por %p221, %p222
      %p224 = scmp.ne.s32.totalorder %s210, %s211
      %p225 = scmp.eq.s32.totalorder %s46, 1
      %p226 = por %p224, %p225
      %p228 = scmp.ne.s32.totalorder %s211, %s227
      %p229 = scmp.eq.s32.totalorder %s46, 0
      %p230 = por %p228, %p229
      %s231 = ssub.s32 %s40, %s47
      %p232 = scmp.eq.s32.totalorder %s231, 0
      %s234 = sadd.s32 %s233, 1
      %s235 = scalar_select %p232, %s233, %s234
      %p238 = pneg %p232
      %p239 = scmp.eq.s32.totalorder %s40, 1
      %p240 = por %p238, %p239
      %p241 = scmp.ne.s32.totalorder %s233, %s236
      %p242 = scmp.eq.s32.totalorder %s40, 0
      %p243 = por %p241, %p242
      %p244 = scmp.ne.s32.totalorder %s233, %s236
      %p245 = scmp.eq.s32.totalorder %s45, 1
      %p246 = por %p244, %p245
      %p247 = scmp.ne.s32.totalorder %s236, %s237
      %p248 = scmp.eq.s32.totalorder %s45, 0
      %p249 = por %p247, %p248
      %p250 = scmp.ne.s32.totalorder %s236, %s237
      %p251 = scmp.eq.s32.totalorder %s46, 1
      %p252 = por %p250, %p251
      %p254 = scmp.ne.s32.totalorder %s237, %s253
      %p255 = scmp.eq.s32.totalorder %s46, 0
      %p256 = por %p254, %p255
      %s257 = ssub.s32 %s40, %s47
      %p258 = scmp.eq.s32.totalorder %s257, 0
      %s260 = sadd.s32 %s259, 1
      %s261 = scalar_select %p258, %s259, %s260
      %p264 = pneg %p258
      %p265 = scmp.eq.s32.totalorder %s40, 1
      %p266 = por %p264, %p265
      %p267 = scmp.ne.s32.totalorder %s259, %s262
      %p268 = scmp.eq.s32.totalorder %s40, 0
      %p269 = por %p267, %p268
      %p270 = scmp.ne.s32.totalorder %s259, %s262
      %p271 = scmp.eq.s32.totalorder %s45, 1
      %p272 = por %p270, %p271
      %p273 = scmp.ne.s32.totalorder %s262, %s263
      %p274 = scmp.eq.s32.totalorder %s45, 0
      %p275 = por %p273, %p274
      %p276 = scmp.ne.s32.totalorder %s262, %s263
      %p277 = scmp.eq.s32.totalorder %s46, 1
      %p278 = por %p276, %p277
      %p280 = scmp.ne.s32.totalorder %s263, %s279
      %p281 = scmp.eq.s32.totalorder %s46, 0
      %p282 = por %p280, %p281
      %s283 = ssub.s32 %s40, %s47
      %p284 = scmp.eq.s32.totalorder %s283, 0
      %s286 = sadd.s32 %s285, 1
      %s287 = scalar_select %p284, %s285, %s286
      %p290 = pneg %p284
      %p291 = scmp.eq.s32.totalorder %s40, 1
      %p292 = por %p290, %p291
      %p293 = scmp.ne.s32.totalorder %s285, %s288
      %p294 = scmp.eq.s32.totalorder %s40, 0
      %p295 = por %p293, %p294
      %p296 = scmp.ne.s32.totalorder %s285, %s288
      %p297 = scmp.eq.s32.totalorder %s45, 1
      %p298 = por %p296, %p297
      %p299 = scmp.ne.s32.totalorder %s288, %s289
      %p300 = scmp.eq.s32.totalorder %s45, 0
      %p301 = por %p299, %p300
      %p302 = scmp.ne.s32.totalorder %s288, %s289
      %p303 = scmp.eq.s32.totalorder %s46, 1
      %p304 = por %p302, %p303
      %p306 = scmp.ne.s32.totalorder %s289, %s305
      %p307 = scmp.eq.s32.totalorder %s46, 0
      %p308 = por %p306, %p307
      %s309 = ssub.s32 %s40, %s47
      %p310 = scmp.eq.s32.totalorder %s309, 0
      %s312 = sadd.s32 %s311, 1
      %s313 = scalar_select %p310, %s311, %s312
      %p316 = pneg %p310
      %p317 = scmp.eq.s32.totalorder %s40, 1
      %p318 = por %p316, %p317
      %p319 = scmp.ne.s32.totalorder %s311, %s314
      %p320 = scmp.eq.s32.totalorder %s40, 0
      %p321 = por %p319, %p320
      %p322 = scmp.ne.s32.totalorder %s311, %s314
      %p323 = scmp.eq.s32.totalorder %s45, 1
      %p324 = por %p322, %p323
      %p325 = scmp.ne.s32.totalorder %s314, %s315
      %p326 = scmp.eq.s32.totalorder %s45, 0
      %p327 = por %p325, %p326
      %p328 = scmp.ne.s32.totalorder %s314, %s315
      %p329 = scmp.eq.s32.totalorder %s46, 1
      %p330 = por %p328, %p329
      %p332 = scmp.ne.s32.totalorder %s315, %s331
      %p333 = scmp.eq.s32.totalorder %s46, 0
      %p334 = por %p332, %p333
      %s335 = ssub.s32 %s40, %s47
      %p336 = scmp.eq.s32.totalorder %s335, 0
      %s338 = sadd.s32 %s337, 1
      %s339 = scalar_select %p336, %s337, %s338
      %p342 = pneg %p336
      %p343 = scmp.eq.s32.totalorder %s40, 1
      %p344 = por %p342, %p343
      %p345 = scmp.ne.s32.totalorder %s337, %s340
      %p346 = scmp.eq.s32.totalorder %s40, 0
      %p347 = por %p345, %p346
      %p348 = scmp.ne.s32.totalorder %s337, %s340
      %p349 = scmp.eq.s32.totalorder %s45, 1
      %p350 = por %p348, %p349
      %p351 = scmp.ne.s32.totalorder %s340, %s341
      %p352 = scmp.eq.s32.totalorder %s45, 0
      %p353 = por %p351, %p352
      %p354 = scmp.ne.s32.totalorder %s340, %s341
      %p355 = scmp.eq.s32.totalorder %s46, 1
      %p356 = por %p354, %p355
      %p358 = scmp.ne.s32.totalorder %s341, %s357
      %p359 = scmp.eq.s32.totalorder %s46, 0
      %p360 = por %p358, %p359
      %s361 = ssub.s32 %s40, %s47
      %p362 = scmp.eq.s32.totalorder %s361, 0
      %s364 = sadd.s32 %s363, 1
      %s365 = scalar_select %p362, %s363, %s364
      %p368 = pneg %p362
      %p369 = scmp.eq.s32.totalorder %s40, 1
      %p370 = por %p368, %p369
      %p371 = scmp.ne.s32.totalorder %s363, %s366
      %p372 = scmp.eq.s32.totalorder %s40, 0
      %p373 = por %p371, %p372
      %p374 = scmp.ne.s32.totalorder %s363, %s366
      %p375 = scmp.eq.s32.totalorder %s45, 1
      %p376 = por %p374, %p375
      %p377 = scmp.ne.s32.totalorder %s366, %s367
      %p378 = scmp.eq.s32.totalorder %s45, 0
      %p379 = por %p377, %p378
      %p380 = scmp.ne.s32.totalorder %s366, %s367
      %p381 = scmp.eq.s32.totalorder %s46, 1
      %p382 = por %p380, %p381
      %p384 = scmp.ne.s32.totalorder %s367, %s383
      %p385 = scmp.eq.s32.totalorder %s46, 0
      %p386 = por %p384, %p385
      %s387 = ssub.s32 %s40, %s47
      %p388 = scmp.eq.s32.totalorder %s387, 0
      %s390 = sadd.s32 %s389, 1
      %s391 = scalar_select %p388, %s389, %s390
      %p394 = pneg %p388
      %p395 = scmp.eq.s32.totalorder %s40, 1
      %p396 = por %p394, %p395
      %p397 = scmp.ne.s32.totalorder %s389, %s392
      %p398 = scmp.eq.s32.totalorder %s40, 0
      %p399 = por %p397, %p398
      %p400 = scmp.ne.s32.totalorder %s389, %s392
      %p401 = scmp.eq.s32.totalorder %s45, 1
      %p402 = por %p400, %p401
      %p403 = scmp.ne.s32.totalorder %s392, %s393
      %p404 = scmp.eq.s32.totalorder %s45, 0
      %p405 = por %p403, %p404
      %p406 = scmp.ne.s32.totalorder %s392, %s393
      %p407 = scmp.eq.s32.totalorder %s46, 1
      %p408 = por %p406, %p407
      %p410 = scmp.ne.s32.totalorder %s393, %s409
      %p411 = scmp.eq.s32.totalorder %s46, 0
      %p412 = por %p410, %p411
      %s413 = ssub.s32 %s40, %s47
      %p414 = scmp.eq.s32.totalorder %s413, 0
      %s416 = sadd.s32 %s415, 1
      %s417 = scalar_select %p414, %s415, %s416
      %p420 = pneg %p414
      %p421 = scmp.eq.s32.totalorder %s40, 1
      %p422 = por %p420, %p421
      %p423 = scmp.ne.s32.totalorder %s415, %s418
      %p424 = scmp.eq.s32.totalorder %s40, 0
      %p425 = por %p423, %p424
      %p426 = scmp.ne.s32.totalorder %s415, %s418
      %p427 = scmp.eq.s32.totalorder %s45, 1
      %p428 = por %p426, %p427
      %p429 = scmp.ne.s32.totalorder %s418, %s419
      %p430 = scmp.eq.s32.totalorder %s45, 0
      %p431 = por %p429, %p430
      %p432 = scmp.ne.s32.totalorder %s418, %s419
      %p433 = scmp.eq.s32.totalorder %s46, 1
      %p434 = por %p432, %p433
      %p436 = scmp.ne.s32.totalorder %s419, %s435
      %p437 = scmp.eq.s32.totalorder %s46, 0
      %p438 = por %p436, %p437
      %s439 = ssub.s32 %s40, %s47
      %p440 = scmp.eq.s32.totalorder %s439, 0
      %s442 = sadd.s32 %s441, 1
      %s443 = scalar_select %p440, %s441, %s442
      %p446 = pneg %p440
      %p447 = scmp.eq.s32.totalorder %s40, 1
      %p448 = por %p446, %p447
      %p449 = scmp.ne.s32.totalorder %s441, %s444
      %p450 = scmp.eq.s32.totalorder %s40, 0
      %p451 = por %p449, %p450
      %p452 = scmp.ne.s32.totalorder %s441, %s444
      %p453 = scmp.eq.s32.totalorder %s45, 1
      %p454 = por %p452, %p453
      %p455 = scmp.ne.s32.totalorder %s444, %s445
      %p456 = scmp.eq.s32.totalorder %s45, 0
      %p457 = por %p455, %p456
      %p458 = scmp.ne.s32.totalorder %s444, %s445
      %p459 = scmp.eq.s32.totalorder %s46, 1
      %p460 = por %p458, %p459
      %p462 = scmp.ne.s32.totalorder %s445, %s461
      %p463 = scmp.eq.s32.totalorder %s46, 0
      %p464 = por %p462, %p463
      %s465 = ssub.s32 %s40, %s47
      %p466 = scmp.eq.s32.totalorder %s465, 0
      %s468 = sadd.s32 %s467, 1
      %s469 = scalar_select %p466, %s467, %s468
      %p472 = pneg %p466
      %p473 = scmp.eq.s32.totalorder %s40, 1
      %p474 = por %p472, %p473
      %p475 = scmp.ne.s32.totalorder %s467, %s470
      %p476 = scmp.eq.s32.totalorder %s40, 0
      %p477 = por %p475, %p476
      %p478 = scmp.ne.s32.totalorder %s467, %s470
      %p479 = scmp.eq.s32.totalorder %s45, 1
      %p480 = por %p478, %p479
      %p481 = scmp.ne.s32.totalorder %s470, %s471
      %p482 = scmp.eq.s32.totalorder %s45, 0
      %p483 = por %p481, %p482
      %p484 = scmp.ne.s32.totalorder %s470, %s471
      %p485 = scmp.eq.s32.totalorder %s46, 1
      %p486 = por %p484, %p485
      %p488 = scmp.ne.s32.totalorder %s471, %s487
      %p489 = scmp.eq.s32.totalorder %s46, 0
      %p490 = por %p488, %p489
      %s491 = ssub.s32 %s40, %s47
      %p492 = scmp.eq.s32.totalorder %s491, 0
      %s494 = sadd.s32 %s493, 1
      %s495 = scalar_select %p492, %s493, %s494
      %p498 = pneg %p492
      %p499 = scmp.eq.s32.totalorder %s40, 1
      %p500 = por %p498, %p499
      %p501 = scmp.ne.s32.totalorder %s493, %s496
      %p502 = scmp.eq.s32.totalorder %s40, 0
      %p503 = por %p501, %p502
      %p504 = scmp.ne.s32.totalorder %s493, %s496
      %p505 = scmp.eq.s32.totalorder %s45, 1
      %p506 = por %p504, %p505
      %p507 = scmp.ne.s32.totalorder %s496, %s497
      %p508 = scmp.eq.s32.totalorder %s45, 0
      %p509 = por %p507, %p508
      %p510 = scmp.ne.s32.totalorder %s496, %s497
      %p511 = scmp.eq.s32.totalorder %s46, 1
      %p512 = por %p510, %p511
      %p514 = scmp.ne.s32.totalorder %s497, %s513
      %p515 = scmp.eq.s32.totalorder %s46, 0
      %p516 = por %p514, %p515
      %s517 = ssub.s32 %s40, %s47
      %p518 = scmp.eq.s32.totalorder %s517, 0
      %s520 = sadd.s32 %s519, 1
      %s521 = scalar_select %p518, %s519, %s520
      %p524 = pneg %p518
      %p525 = scmp.eq.s32.totalorder %s40, 1
      %p526 = por %p524, %p525
      %p527 = scmp.ne.s32.totalorder %s519, %s522
      %p528 = scmp.eq.s32.totalorder %s40, 0
      %p529 = por %p527, %p528
      %p530 = scmp.ne.s32.totalorder %s519, %s522
      %p531 = scmp.eq.s32.totalorder %s45, 1
      %p532 = por %p530, %p531
      %p533 = scmp.ne.s32.totalorder %s522, %s523
      %p534 = scmp.eq.s32.totalorder %s45, 0
      %p535 = por %p533, %p534
      %p536 = scmp.ne.s32.totalorder %s522, %s523
      %p537 = scmp.eq.s32.totalorder %s46, 1
      %p538 = por %p536, %p537
      %p540 = scmp.ne.s32.totalorder %s523, %s539
      %p541 = scmp.eq.s32.totalorder %s46, 0
      %p542 = por %p540, %p541
      %s543 = ssub.s32 %s40, %s47
      %p544 = scmp.eq.s32.totalorder %s543, 0
      %s546 = sadd.s32 %s545, 1
      %s547 = scalar_select %p544, %s545, %s546
      %p550 = pneg %p544
      %p551 = scmp.eq.s32.totalorder %s40, 1
      %p552 = por %p550, %p551
      %p553 = scmp.ne.s32.totalorder %s545, %s548
      %p554 = scmp.eq.s32.totalorder %s40, 0
      %p555 = por %p553, %p554
      %p556 = scmp.ne.s32.totalorder %s545, %s548
      %p557 = scmp.eq.s32.totalorder %s45, 1
      %p558 = por %p556, %p557
      %p559 = scmp.ne.s32.totalorder %s548, %s549
      %p560 = scmp.eq.s32.totalorder %s45, 0
      %p561 = por %p559, %p560
      %p562 = scmp.ne.s32.totalorder %s548, %s549
      %p563 = scmp.eq.s32.totalorder %s46, 1
      %p564 = por %p562, %p563
      %p566 = scmp.ne.s32.totalorder %s549, %s565
      %p567 = scmp.eq.s32.totalorder %s46, 0
      %p568 = por %p566, %p567
      %s570 = sadd.s32 %s569, 1
      %p573 = scmp.eq.s32.totalorder %s40, 1
      %p574 = scmp.ne.s32.totalorder %s569, %s571
      %p575 = scmp.eq.s32.totalorder %s40, 0
      %p576 = por %p574, %p575
      %p577 = scmp.ne.s32.totalorder %s569, %s571
      %p578 = scmp.eq.s32.totalorder %s45, 1
      %p579 = por %p577, %p578
      %p580 = scmp.ne.s32.totalorder %s571, %s572
      %p581 = scmp.eq.s32.totalorder %s45, 0
      %p582 = por %p580, %p581
      %p583 = scmp.ne.s32.totalorder %s571, %s572
      %p584 = scmp.eq.s32.totalorder %s46, 1
      %p585 = por %p583, %p584
      %p587 = scmp.ne.s32.totalorder %s572, %s586
      %p588 = scmp.eq.s32.totalorder %s46, 0
      %p589 = por %p587, %p588
      %s591 = sadd.s32 %s590, 1
      %p594 = scmp.eq.s32.totalorder %s40, 1
      %p595 = scmp.ne.s32.totalorder %s590, %s592
      %p596 = scmp.eq.s32.totalorder %s40, 0
      %p597 = por %p595, %p596
      %p598 = scmp.ne.s32.totalorder %s590, %s592
      %p599 = scmp.eq.s32.totalorder %s45, 1
      %p600 = por %p598, %p599
      %p601 = scmp.ne.s32.totalorder %s592, %s593
      %p602 = scmp.eq.s32.totalorder %s45, 0
      %p603 = por %p601, %p602
      %p604 = scmp.ne.s32.totalorder %s592, %s593
      %p605 = scmp.eq.s32.totalorder %s46, 1
      %p606 = por %p604, %p605
      %p608 = scmp.ne.s32.totalorder %s593, %s607
      %p609 = scmp.eq.s32.totalorder %s46, 0
      %p610 = por %p608, %p609
      %s612 = sadd.s32 %s611, 1
      %p615 = scmp.eq.s32.totalorder %s40, 1
      %p616 = scmp.ne.s32.totalorder %s611, %s613
      %p617 = scmp.eq.s32.totalorder %s40, 0
      %p618 = por %p616, %p617
      %p619 = scmp.ne.s32.totalorder %s611, %s613
      %p620 = scmp.eq.s32.totalorder %s45, 1
      %p621 = por %p619, %p620
      %p622 = scmp.ne.s32.totalorder %s613, %s614
      %p623 = scmp.eq.s32.totalorder %s45, 0
      %p624 = por %p622, %p623
      %p625 = scmp.ne.s32.totalorder %s613, %s614
      %p626 = scmp.eq.s32.totalorder %s46, 1
      %p627 = por %p625, %p626
      %p629 = scmp.ne.s32.totalorder %s614, %s628
      %p630 = scmp.eq.s32.totalorder %s46, 0
      %p631 = por %p629, %p630
      %p632 = scmp.le.s32.totalorder 1, %s40
      %p633 = scmp.lt.s32.totalorder %s40, 3
      %p634 = pnand %p632, %p633
      %p635 = pneg %p634
      // Predicated region
      $region9: #{tpu_custom_call.1} parent=5 // pred_check
        _
      $region10: #{tpu_custom_call.1} parent=5 // pred_check_branch
        %637 = sbr.rel (%p634) target = $region12
      $region11: #{tpu_custom_call.1} parent=5 // pred_region
        %s638 = ssub.s32 %s40, 1
        // Predicated region
        $region13: #{tpu_custom_call.1} parent=11 // pred_check
          %p639 = pneg %p61
        $region14: #{tpu_custom_call.1} parent=11 // pred_check_branch
          %641 = sbr.rel (%p639) target = $region16
        $region15: #{tpu_custom_call.1} parent=11 // pred_region
          %643 = vsyncadd [#allocation5], 0
          %s644 = sshll.u32 %s0, 4
          %s645 = int_to_ptr.hbm [resolvable:$true] %s644
          %s646 = sshll.u32 [#allocation4], 4
          %s647 = int_to_ptr.vmem [resolvable:$true] %s646
          %652 = dma.hbm_to_vmem [thread:$0]  %s645, 256, %s647, [#allocation5], 128, 128, 8
        $region16: #{tpu_custom_call.1} parent=11 // pred_fallthru
          _
        // Predicated region
        $region17: #{tpu_custom_call.1} parent=11 // pred_check
          %p653 = pneg %p82
        $region18: #{tpu_custom_call.1} parent=11 // pred_check_branch
          %655 = sbr.rel (%p653) target = $region20
        $region19: #{tpu_custom_call.1} parent=11 // pred_region
          %657 = vsyncadd [#allocation8], 0
          %s658 = sshll.u32 %s1, 4
          %s659 = int_to_ptr.hbm [resolvable:$true] %s658
          %s660 = sshll.u32 [#allocation7], 4
          %s661 = int_to_ptr.vmem [resolvable:$true] %s660
          %666 = dma.hbm_to_vmem [thread:$0]  %s659, 256, %s661, [#allocation8], 128, 128, 8
        $region20: #{tpu_custom_call.1} parent=11 // pred_fallthru
          _
        // Predicated region
        $region21: #{tpu_custom_call.1} parent=11 // pred_check
          %p667 = pneg %p103
        $region22: #{tpu_custom_call.1} parent=11 // pred_check_branch
          %669 = sbr.rel (%p667) target = $region24
        $region23: #{tpu_custom_call.1} parent=11 // pred_region
          %671 = vsyncadd [#allocation8], 0
          %s673 = sshll.u32 %s2, 4
          %s674 = int_to_ptr.hbm [resolvable:$true] %s673
          %s675 = sshll.u32 [#allocation9], 4
          %s676 = int_to_ptr.vmem [resolvable:$true] %s675
          %678 = dma.hbm_to_vmem [thread:$0]  %s674, 32, %s676, [#allocation8]
        $region24: #{tpu_custom_call.1} parent=11 // pred_fallthru
          _
        // Predicated region
        $region25: #{tpu_custom_call.1} parent=11 // pred_check
          %p679 = pneg %p124
        $region26: #{tpu_custom_call.1} parent=11 // pred_check_branch
          %681 = sbr.rel (%p679) target = $region28
        $region27: #{tpu_custom_call.1} parent=11 // pred_region
          %683 = vsyncadd [#allocation11], 0
          %s685 = sshll.u32 %s3, 4
          %s686 = int_to_ptr.hbm [resolvable:$true] %s685
          %s687 = sshll.u32 [#allocation10], 4
          %s688 = int_to_ptr.vmem [resolvable:$true] %s687
          %690 = dma.hbm_to_vmem [thread:$0]  %s686, 16, %s688, [#allocation11]
        $region28: #{tpu_custom_call.1} parent=11 // pred_fallthru
          _
        // Predicated region
        $region29: #{tpu_custom_call.1} parent=11 // pred_check
          %p691 = pneg %p145
        $region30: #{tpu_custom_call.1} parent=11 // pred_check_branch
          %693 = sbr.rel (%p691) target = $region32
        $region31: #{tpu_custom_call.1} parent=11 // pred_region
          %695 = vsyncadd [#allocation11], 0
          %s697 = sshll.u32 %s4, 4
          %s698 = int_to_ptr.hbm [resolvable:$true] %s697
          %s699 = sshll.u32 [#allocation12], 4
          %s700 = int_to_ptr.vmem [resolvable:$true] %s699
          %702 = dma.hbm_to_vmem [thread:$0]  %s698, 16, %s700, [#allocation11]
        $region32: #{tpu_custom_call.1} parent=11 // pred_fallthru
          _
        // Predicated region
        $region33: #{tpu_custom_call.1} parent=11 // pred_check
          %p703 = pneg %p582
        $region34: #{tpu_custom_call.1} parent=11 // pred_check_branch
          %705 = sbr.rel (%p703) target = $region36
        $region35: #{tpu_custom_call.1} parent=11 // pred_region
          %707 = vsyncadd [#allocation20], 0
          %s708 = sshll.u32 %s21, 4
          %s709 = int_to_ptr.hbm [resolvable:$true] %s708
          %s710 = sshll.u32 [#allocation19], 4
          %s711 = int_to_ptr.vmem [resolvable:$true] %s710
          %716 = dma.hbm_to_vmem [thread:$0]  %s709, 512, %s711, [#allocation20], 128, 128, 8
        $region36: #{tpu_custom_call.1} parent=11 // pred_fallthru
          _
        // Predicated region
        $region37: #{tpu_custom_call.1} parent=11 // pred_check
          %p717 = pneg %p603
        $region38: #{tpu_custom_call.1} parent=11 // pred_check_branch
          %719 = sbr.rel (%p717) target = $region40
        $region39: #{tpu_custom_call.1} parent=11 // pred_region
          _
        $region40: #{tpu_custom_call.1} parent=11 // pred_fallthru
          _
      $region12: #{tpu_custom_call.1} parent=5 // pred_fallthru
        _
      %p720 = scmp.lt.s32.totalorder %s40, 2
      // Predicated region
      $region41: #{tpu_custom_call.1} parent=5 // pred_check
        %p721 = pneg %p720
      $region42: #{tpu_custom_call.1} parent=5 // pred_check_branch
        %723 = sbr.rel (%p721) target = $region44
      $region43: #{tpu_custom_call.1} parent=5 // pred_region
        // Predicated region
        $region45: #{tpu_custom_call.1} parent=43 // pred_check
          %p724 = pneg %p165
        $region46: #{tpu_custom_call.1} parent=43 // pred_check_branch
          %726 = sbr.rel (%p724) target = $region48
        $region47: #{tpu_custom_call.1} parent=43 // pred_region
          %p727 = scmp.lt.s32.totalorder %s40, 1
          %s728 = scalar_select %p727, %s40, 1
          %s729 = smul.addr %s728, 4
          %s730 = smul.addr %s729, 8
          %s731 = scalar_lea.vmem %s5, %s730
        $region48: #{tpu_custom_call.1} parent=43 // pred_fallthru
          _
        // Predicated region
        $region49: #{tpu_custom_call.1} parent=43 // pred_check
          %p732 = pneg %p191
        $region50: #{tpu_custom_call.1} parent=43 // pred_check_branch
          %734 = sbr.rel (%p732) target = $region52
        $region51: #{tpu_custom_call.1} parent=43 // pred_region
          %p735 = scmp.lt.s32.totalorder %s40, 1
          %s736 = scalar_select %p735, %s40, 1
          %s737 = scalar_lea.vmem %s6, %s736
        $region52: #{tpu_custom_call.1} parent=43 // pred_fallthru
          _
        // Predicated region
        $region53: #{tpu_custom_call.1} parent=43 // pred_check
          %p738 = pneg %p217
        $region54: #{tpu_custom_call.1} parent=43 // pred_check_branch
          %740 = sbr.rel (%p738) target = $region56
        $region55: #{tpu_custom_call.1} parent=43 // pred_region
          %p741 = scmp.lt.s32.totalorder %s40, 1
          %s742 = scalar_select %p741, %s40, 1
          %s743 = smul.addr %s742, 4
          %s744 = smul.addr %s743, 8
          %s745 = scalar_lea.vmem %s7, %s744
        $region56: #{tpu_custom_call.1} parent=43 // pred_fallthru
          _
        // Predicated region
        $region57: #{tpu_custom_call.1} parent=43 // pred_check
          %p746 = pneg %p243
        $region58: #{tpu_custom_call.1} parent=43 // pred_check_branch
          %748 = sbr.rel (%p746) target = $region60
        $region59: #{tpu_custom_call.1} parent=43 // pred_region
          %p749 = scmp.lt.s32.totalorder %s40, 1
          %s750 = scalar_select %p749, %s40, 1
          %s751 = scalar_lea.vmem %s8, %s750
        $region60: #{tpu_custom_call.1} parent=43 // pred_fallthru
          _
        // Predicated region
        $region61: #{tpu_custom_call.1} parent=43 // pred_check
          %p752 = pneg %p269
        $region62: #{tpu_custom_call.1} parent=43 // pred_check_branch
          %754 = sbr.rel (%p752) target = $region64
        $region63: #{tpu_custom_call.1} parent=43 // pred_region
          %p755 = scmp.lt.s32.totalorder %s40, 1
          %s756 = scalar_select %p755, %s40, 1
          %s757 = smul.addr %s756, 4
          %s758 = smul.addr %s757, 8
          %s759 = scalar_lea.vmem %s9, %s758
        $region64: #{tpu_custom_call.1} parent=43 // pred_fallthru
          _
        // Predicated region
        $region65: #{tpu_custom_call.1} parent=43 // pred_check
          %p760 = pneg %p295
        $region66: #{tpu_custom_call.1} parent=43 // pred_check_branch
          %762 = sbr.rel (%p760) target = $region68
        $region67: #{tpu_custom_call.1} parent=43 // pred_region
          %p763 = scmp.lt.s32.totalorder %s40, 1
          %s764 = scalar_select %p763, %s40, 1
          %s765 = scalar_lea.vmem %s10, %s764
        $region68: #{tpu_custom_call.1} parent=43 // pred_fallthru
          _
        // Predicated region
        $region69: #{tpu_custom_call.1} parent=43 // pred_check
          %p766 = pneg %p321
        $region70: #{tpu_custom_call.1} parent=43 // pred_check_branch
          %768 = sbr.rel (%p766) target = $region72
        $region71: #{tpu_custom_call.1} parent=43 // pred_region
          %s769 = sand.u32 %s40, 1
          %s770 = scalar_lea.sflag [#allocation14], %s769
          %s771 = sand.u32 %s311, 1
          %s772 = smul.addr %s771, 32
          %s773 = scalar_lea.vmem [#allocation13], %s772
          %775 = vsyncadd %s770, 0
          %s776 = smul.addr %s40, 4
          %s777 = smul.addr %s776, 8
          %s778 = scalar_lea.hbm %s11, %s777
          %s779 = sshll.u32 %s778, 4
          %s780 = int_to_ptr.hbm [resolvable:$true] %s779
          %s781 = sshll.u32 %s773, 4
          %s782 = int_to_ptr.vmem [resolvable:$true] %s781
          %787 = dma.hbm_to_vmem [thread:$0]  %s780, 512, %s782, %s770, 128, 128, 8
        $region72: #{tpu_custom_call.1} parent=43 // pred_fallthru
          _
        // Predicated region
        $region73: #{tpu_custom_call.1} parent=43 // pred_check
          %p788 = pneg %p347
        $region74: #{tpu_custom_call.1} parent=43 // pred_check_branch
          %790 = sbr.rel (%p788) target = $region76
        $region75: #{tpu_custom_call.1} parent=43 // pred_region
          %p791 = scmp.lt.s32.totalorder %s40, 1
          %s792 = scalar_select %p791, %s40, 1
          %s793 = scalar_lea.vmem %s12, %s792
        $region76: #{tpu_custom_call.1} parent=43 // pred_fallthru
          _
        // Predicated region
        $region77: #{tpu_custom_call.1} parent=43 // pred_check
          %p794 = pneg %p373
        $region78: #{tpu_custom_call.1} parent=43 // pred_check_branch
          %796 = sbr.rel (%p794) target = $region80
        $region79: #{tpu_custom_call.1} parent=43 // pred_region
          %p797 = scmp.lt.s32.totalorder %s40, 1
          %s798 = scalar_select %p797, %s40, 1
          %s799 = scalar_lea.vmem %s13, %s798
        $region80: #{tpu_custom_call.1} parent=43 // pred_fallthru
          _
        // Predicated region
        $region81: #{tpu_custom_call.1} parent=43 // pred_check
          %p800 = pneg %p399
        $region82: #{tpu_custom_call.1} parent=43 // pred_check_branch
          %802 = sbr.rel (%p800) target = $region84
        $region83: #{tpu_custom_call.1} parent=43 // pred_region
          %s803 = sand.u32 %s40, 1
          %s804 = scalar_lea.sflag [#allocation14], %s803
          %s805 = sand.u32 %s389, 1
          %s806 = scalar_lea.vmem [#allocation15], %s805
          %808 = vsyncadd %s804, 0
          %s809 = scalar_lea.hbm %s14, %s40
          %s811 = sshll.u32 %s809, 4
          %s812 = int_to_ptr.hbm [resolvable:$true] %s811
          %s813 = sshll.u32 %s806, 4
          %s814 = int_to_ptr.vmem [resolvable:$true] %s813
          %816 = dma.hbm_to_vmem [thread:$0]  %s812, 16, %s814, %s804
        $region84: #{tpu_custom_call.1} parent=43 // pred_fallthru
          _
        // Predicated region
        $region85: #{tpu_custom_call.1} parent=43 // pred_check
          %p817 = pneg %p425
        $region86: #{tpu_custom_call.1} parent=43 // pred_check_branch
          %819 = sbr.rel (%p817) target = $region88
        $region87: #{tpu_custom_call.1} parent=43 // pred_region
          %s820 = sand.u32 %s40, 1
          %s821 = scalar_lea.sflag [#allocation17], %s820
          %s822 = sand.u32 %s415, 1
          %s823 = smul.addr %s822, 32
          %s824 = scalar_lea.vmem [#allocation16], %s823
          %826 = vsyncadd %s821, 0
          %s827 = smul.addr %s40, 4
          %s828 = smul.addr %s827, 8
          %s829 = scalar_lea.hbm %s15, %s828
          %s830 = sshll.u32 %s829, 4
          %s831 = int_to_ptr.hbm [resolvable:$true] %s830
          %s832 = sshll.u32 %s824, 4
          %s833 = int_to_ptr.vmem [resolvable:$true] %s832
          %838 = dma.hbm_to_vmem [thread:$0]  %s831, 512, %s833, %s821, 128, 128, 8
        $region88: #{tpu_custom_call.1} parent=43 // pred_fallthru
          _
        // Predicated region
        $region89: #{tpu_custom_call.1} parent=43 // pred_check
          %p839 = pneg %p451
        $region90: #{tpu_custom_call.1} parent=43 // pred_check_branch
          %841 = sbr.rel (%p839) target = $region92
        $region91: #{tpu_custom_call.1} parent=43 // pred_region
          %p842 = scmp.lt.s32.totalorder %s40, 1
          %s843 = scalar_select %p842, %s40, 1
          %s844 = scalar_lea.vmem %s16, %s843
        $region92: #{tpu_custom_call.1} parent=43 // pred_fallthru
          _
        // Predicated region
        $region93: #{tpu_custom_call.1} parent=43 // pred_check
          %p845 = pneg %p477
        $region94: #{tpu_custom_call.1} parent=43 // pred_check_branch
          %847 = sbr.rel (%p845) target = $region96
        $region95: #{tpu_custom_call.1} parent=43 // pred_region
          %p848 = scmp.lt.s32.totalorder %s40, 1
          %s849 = scalar_select %p848, %s40, 1
          %s850 = smul.addr %s849, 8
          %s851 = smul.addr %s850, 8
          %s852 = scalar_lea.vmem %s17, %s851
        $region96: #{tpu_custom_call.1} parent=43 // pred_fallthru
          _
        // Predicated region
        $region97: #{tpu_custom_call.1} parent=43 // pred_check
          %p853 = pneg %p503
        $region98: #{tpu_custom_call.1} parent=43 // pred_check_branch
          %855 = sbr.rel (%p853) target = $region100
        $region99: #{tpu_custom_call.1} parent=43 // pred_region
          %p856 = scmp.lt.s32.totalorder %s40, 1
          %s857 = scalar_select %p856, %s40, 1
          %s858 = scalar_lea.vmem %s18, %s857
        $region100: #{tpu_custom_call.1} parent=43 // pred_fallthru
          _
        // Predicated region
        $region101: #{tpu_custom_call.1} parent=43 // pred_check
          %p859 = pneg %p529
        $region102: #{tpu_custom_call.1} parent=43 // pred_check_branch
          %861 = sbr.rel (%p859) target = $region104
        $region103: #{tpu_custom_call.1} parent=43 // pred_region
          %p862 = scmp.lt.s32.totalorder %s40, 1
          %s863 = scalar_select %p862, %s40, 1
          %s864 = scalar_lea.vmem %s19, %s863
        $region104: #{tpu_custom_call.1} parent=43 // pred_fallthru
          _
        // Predicated region
        $region105: #{tpu_custom_call.1} parent=43 // pred_check
          %p865 = pneg %p555
        $region106: #{tpu_custom_call.1} parent=43 // pred_check_branch
          %867 = sbr.rel (%p865) target = $region108
        $region107: #{tpu_custom_call.1} parent=43 // pred_region
          %s868 = sand.u32 %s40, 1
          %s869 = scalar_lea.sflag [#allocation17], %s868
          %s870 = sand.u32 %s545, 1
          %s871 = scalar_lea.vmem [#allocation18], %s870
          %873 = vsyncadd %s869, 0
          %s874 = scalar_lea.hbm %s20, %s40
          %s876 = sshll.u32 %s874, 4
          %s877 = int_to_ptr.hbm [resolvable:$true] %s876
          %s878 = sshll.u32 %s871, 4
          %s879 = int_to_ptr.vmem [resolvable:$true] %s878
          %881 = dma.hbm_to_vmem [thread:$0]  %s877, 16, %s879, %s869
        $region108: #{tpu_custom_call.1} parent=43 // pred_fallthru
          _
      $region44: #{tpu_custom_call.1} parent=5 // pred_fallthru
        _
      %p882 = scmp.le.s32.totalorder 1, %s40
      %p883 = scmp.lt.s32.totalorder %s40, 3
      %p884 = pnand %p882, %p883
      %p885 = pneg %p884
      // Predicated region
      $region109: #{tpu_custom_call.1} parent=5 // pred_check
        _
      $region110: #{tpu_custom_call.1} parent=5 // pred_check_branch
        %887 = sbr.rel (%p884) target = $region112
      $region111: #{tpu_custom_call.1} parent=5 // pred_region
        %s888 = ssub.s32 %s40, 1
        // Predicated region
        $region113: #{tpu_custom_call.1} parent=111 // pred_check
          %p889 = pneg %p61
        $region114: #{tpu_custom_call.1} parent=111 // pred_check_branch
          %891 = sbr.rel (%p889) target = $region116
        $region115: #{tpu_custom_call.1} parent=111 // pred_region
          %893 = dma.done [#allocation5], 256
        $region116: #{tpu_custom_call.1} parent=111 // pred_fallthru
          _
        // Predicated region
        $region117: #{tpu_custom_call.1} parent=111 // pred_check
          %p894 = pneg %p82
        $region118: #{tpu_custom_call.1} parent=111 // pred_check_branch
          %896 = sbr.rel (%p894) target = $region120
        $region119: #{tpu_custom_call.1} parent=111 // pred_region
          %898 = dma.done [#allocation8], 256
        $region120: #{tpu_custom_call.1} parent=111 // pred_fallthru
          _
        // Predicated region
        $region121: #{tpu_custom_call.1} parent=111 // pred_check
          %p899 = pneg %p103
        $region122: #{tpu_custom_call.1} parent=111 // pred_check_branch
          %901 = sbr.rel (%p899) target = $region124
        $region123: #{tpu_custom_call.1} parent=111 // pred_region
          %903 = dma.done [#allocation8], 32
        $region124: #{tpu_custom_call.1} parent=111 // pred_fallthru
          _
        // Predicated region
        $region125: #{tpu_custom_call.1} parent=111 // pred_check
          %p904 = pneg %p124
        $region126: #{tpu_custom_call.1} parent=111 // pred_check_branch
          %906 = sbr.rel (%p904) target = $region128
        $region127: #{tpu_custom_call.1} parent=111 // pred_region
          %908 = dma.done [#allocation11], 16
        $region128: #{tpu_custom_call.1} parent=111 // pred_fallthru
          _
        // Predicated region
        $region129: #{tpu_custom_call.1} parent=111 // pred_check
          %p909 = pneg %p145
        $region130: #{tpu_custom_call.1} parent=111 // pred_check_branch
          %911 = sbr.rel (%p909) target = $region132
        $region131: #{tpu_custom_call.1} parent=111 // pred_region
          %913 = dma.done [#allocation11], 16
        $region132: #{tpu_custom_call.1} parent=111 // pred_fallthru
          _
        %s914 = sand.u32 %s45, 1
        %s915 = scalar_lea.sflag [#allocation14], %s914
        %s916 = sand.u32 %s314, 1
        %s917 = smul.addr %s916, 32
        %s918 = scalar_lea.vmem [#allocation13], %s917
        // Predicated region
        $region133: #{tpu_custom_call.1} parent=111 // pred_check
          %p919 = pneg %p327
        $region134: #{tpu_custom_call.1} parent=111 // pred_check_branch
          %921 = sbr.rel (%p919) target = $region136
        $region135: #{tpu_custom_call.1} parent=111 // pred_region
          %923 = dma.done %s915, 512
        $region136: #{tpu_custom_call.1} parent=111 // pred_fallthru
          _
        %s924 = sand.u32 %s45, 1
        %s925 = scalar_lea.sflag [#allocation14], %s924
        %s926 = sand.u32 %s392, 1
        %s927 = scalar_lea.vmem [#allocation15], %s926
        // Predicated region
        $region137: #{tpu_custom_call.1} parent=111 // pred_check
          %p928 = pneg %p405
        $region138: #{tpu_custom_call.1} parent=111 // pred_check_branch
          %930 = sbr.rel (%p928) target = $region140
        $region139: #{tpu_custom_call.1} parent=111 // pred_region
          %932 = dma.done %s925, 16
        $region140: #{tpu_custom_call.1} parent=111 // pred_fallthru
          _
        %s933 = sand.u32 %s45, 1
        %s934 = scalar_lea.sflag [#allocation17], %s933
        %s935 = sand.u32 %s418, 1
        %s936 = smul.addr %s935, 32
        %s937 = scalar_lea.vmem [#allocation16], %s936
        // Predicated region
        $region141: #{tpu_custom_call.1} parent=111 // pred_check
          %p938 = pneg %p431
        $region142: #{tpu_custom_call.1} parent=111 // pred_check_branch
          %940 = sbr.rel (%p938) target = $region144
        $region143: #{tpu_custom_call.1} parent=111 // pred_region
          %942 = dma.done %s934, 512
        $region144: #{tpu_custom_call.1} parent=111 // pred_fallthru
          _
        %s943 = sand.u32 %s45, 1
        %s944 = scalar_lea.sflag [#allocation17], %s943
        %s945 = sand.u32 %s548, 1
        %s946 = scalar_lea.vmem [#allocation18], %s945
        // Predicated region
        $region145: #{tpu_custom_call.1} parent=111 // pred_check
          %p947 = pneg %p561
        $region146: #{tpu_custom_call.1} parent=111 // pred_check_branch
          %949 = sbr.rel (%p947) target = $region148
        $region147: #{tpu_custom_call.1} parent=111 // pred_region
          %951 = dma.done %s944, 16
        $region148: #{tpu_custom_call.1} parent=111 // pred_fallthru
          _
        // Predicated region
        $region149: #{tpu_custom_call.1} parent=111 // pred_check
          %p952 = pneg %p582
        $region150: #{tpu_custom_call.1} parent=111 // pred_check_branch
          %954 = sbr.rel (%p952) target = $region152
        $region151: #{tpu_custom_call.1} parent=111 // pred_region
          %956 = dma.done [#allocation20], 512
        $region152: #{tpu_custom_call.1} parent=111 // pred_fallthru
          _
        %p957 = pneg %p61
        %p958 = pneg %p58
        %p959 = pneg %p82
        %p960 = pneg %p79
        %p961 = pneg %p103
        %p962 = pneg %p100
        %p963 = pneg %p124
        %p964 = pneg %p121
        %p965 = pneg %p145
        %p966 = pneg %p142
        %p967 = scmp.lt.s32.totalorder %s45, 1
        %s968 = scalar_select %p967, %s45, 1
        %s969 = smul.addr %s968, 4
        %s970 = smul.addr %s969, 8
        %s971 = scalar_lea.vmem %s5, %s970
        %p972 = pneg %p171
        %p973 = pneg %p168
        %p974 = scmp.lt.s32.totalorder %s45, 1
        %s975 = scalar_select %p974, %s45, 1
        %s976 = scalar_lea.vmem %s6, %s975
        %p977 = pneg %p197
        %p978 = pneg %p194
        %p979 = scmp.lt.s32.totalorder %s45, 1
        %s980 = scalar_select %p979, %s45, 1
        %s981 = smul.addr %s980, 4
        %s982 = smul.addr %s981, 8
        %s983 = scalar_lea.vmem %s7, %s982
        %p984 = pneg %p223
        %p985 = pneg %p220
        %p986 = scmp.lt.s32.totalorder %s45, 1
        %s987 = scalar_select %p986, %s45, 1
        %s988 = scalar_lea.vmem %s8, %s987
        %p989 = pneg %p249
        %p990 = pneg %p246
        %p991 = scmp.lt.s32.totalorder %s45, 1
        %s992 = scalar_select %p991, %s45, 1
        %s993 = smul.addr %s992, 4
        %s994 = smul.addr %s993, 8
        %s995 = scalar_lea.vmem %s9, %s994
        %p996 = pneg %p275
        %p997 = pneg %p272
        %p998 = scmp.lt.s32.totalorder %s45, 1
        %s999 = scalar_select %p998, %s45, 1
        %s1000 = scalar_lea.vmem %s10, %s999
        %p1001 = pneg %p301
        %p1002 = pneg %p298
        %s1003 = sand.u32 %s45, 1
        %s1004 = scalar_lea.sflag [#allocation14], %s1003
        %s1005 = sand.u32 %s314, 1
        %s1006 = smul.addr %s1005, 32
        %s1007 = scalar_lea.vmem [#allocation13], %s1006
        %p1008 = pneg %p327
        %p1009 = pneg %p324
        %p1010 = scmp.lt.s32.totalorder %s45, 1
        %s1011 = scalar_select %p1010, %s45, 1
        %s1012 = scalar_lea.vmem %s12, %s1011
        %p1013 = pneg %p353
        %p1014 = pneg %p350
        %p1015 = scmp.lt.s32.totalorder %s45, 1
        %s1016 = scalar_select %p1015, %s45, 1
        %s1017 = scalar_lea.vmem %s13, %s1016
        %p1018 = pneg %p379
        %p1019 = pneg %p376
        %s1020 = sand.u32 %s45, 1
        %s1021 = scalar_lea.sflag [#allocation14], %s1020
        %s1022 = sand.u32 %s392, 1
        %s1023 = scalar_lea.vmem [#allocation15], %s1022
        %p1024 = pneg %p405
        %p1025 = pneg %p402
        %s1026 = sand.u32 %s45, 1
        %s1027 = scalar_lea.sflag [#allocation17], %s1026
        %s1028 = sand.u32 %s418, 1
        %s1029 = smul.addr %s1028, 32
        %s1030 = scalar_lea.vmem [#allocation16], %s1029
        %p1031 = pneg %p431
        %p1032 = pneg %p428
        %p1033 = scmp.lt.s32.totalorder %s45, 1
        %s1034 = scalar_select %p1033, %s45, 1
        %s1035 = scalar_lea.vmem %s16, %s1034
        %p1036 = pneg %p457
        %p1037 = pneg %p454
        %p1038 = scmp.lt.s32.totalorder %s45, 1
        %s1039 = scalar_select %p1038, %s45, 1
        %s1040 = smul.addr %s1039, 8
        %s1041 = smul.addr %s1040, 8
        %s1042 = scalar_lea.vmem %s17, %s1041
        %p1043 = pneg %p483
        %p1044 = pneg %p480
        %p1045 = scmp.lt.s32.totalorder %s45, 1
        %s1046 = scalar_select %p1045, %s45, 1
        %s1047 = scalar_lea.vmem %s18, %s1046
        %p1048 = pneg %p509
        %p1049 = pneg %p506
        %p1050 = scmp.lt.s32.totalorder %s45, 1
        %s1051 = scalar_select %p1050, %s45, 1
        %s1052 = scalar_lea.vmem %s19, %s1051
        %p1053 = pneg %p535
        %p1054 = pneg %p532
        %s1055 = sand.u32 %s45, 1
        %s1056 = scalar_lea.sflag [#allocation17], %s1055
        %s1057 = sand.u32 %s548, 1
        %s1058 = scalar_lea.vmem [#allocation18], %s1057
        %p1059 = pneg %p561
        %p1060 = pneg %p558
        %p1061 = pneg %p582
        %p1062 = pneg %p579
        %p1063 = pneg %p603
        %p1064 = pneg %p600
        %p1065 = pneg %p624
        %p1066 = pneg %p621
        %p1067 = scmp.lt.s32.totalorder %s45, 1
        %s1068 = scalar_select %p1067, %s45, 1
        %s1069 = smul.addr %s1068, 4
        %s1070 = smul.addr %s1069, 8
        %s1071 = scalar_lea.vmem %s5, %s1070
        %p1072 = scmp.lt.s32.totalorder %s45, 1
        %s1073 = scalar_select %p1072, %s45, 1
        %s1074 = scalar_lea.vmem %s6, %s1073
        %p1075 = scmp.lt.s32.totalorder %s45, 1
        %s1076 = scalar_select %p1075, %s45, 1
        %s1077 = smul.addr %s1076, 4
        %s1078 = smul.addr %s1077, 8
        %s1079 = scalar_lea.vmem %s7, %s1078
        %p1080 = scmp.lt.s32.totalorder %s45, 1
        %s1081 = scalar_select %p1080, %s45, 1
        %s1082 = scalar_lea.vmem %s8, %s1081
        %p1083 = scmp.lt.s32.totalorder %s45, 1
        %s1084 = scalar_select %p1083, %s45, 1
        %s1085 = smul.addr %s1084, 4
        %s1086 = smul.addr %s1085, 8
        %s1087 = scalar_lea.vmem %s9, %s1086
        %p1088 = scmp.lt.s32.totalorder %s45, 1
        %s1089 = scalar_select %p1088, %s45, 1
        %s1090 = scalar_lea.vmem %s10, %s1089
        %p1091 = scmp.lt.s32.totalorder %s45, 1
        %s1092 = scalar_select %p1091, %s45, 1
        %s1093 = scalar_lea.vmem %s12, %s1092
        %p1094 = scmp.lt.s32.totalorder %s45, 1
        %s1095 = scalar_select %p1094, %s45, 1
        %s1096 = scalar_lea.vmem %s13, %s1095
        %p1097 = scmp.lt.s32.totalorder %s45, 1
        %s1098 = scalar_select %p1097, %s45, 1
        %s1099 = scalar_lea.vmem %s16, %s1098
        %p1100 = scmp.lt.s32.totalorder %s45, 1
        %s1101 = scalar_select %p1100, %s45, 1
        %s1102 = smul.addr %s1101, 8
        %s1103 = smul.addr %s1102, 8
        %s1104 = scalar_lea.vmem %s17, %s1103
        %p1105 = scmp.lt.s32.totalorder %s45, 1
        %s1106 = scalar_select %p1105, %s45, 1
        %s1107 = scalar_lea.vmem %s18, %s1106
        %p1108 = scmp.lt.s32.totalorder %s45, 1
        %s1109 = scalar_select %p1108, %s45, 1
        %s1110 = scalar_lea.vmem %s19, %s1109
        %p1111 = scmp.eq.s32.totalorder %s45, 0
        // Predicated region
        $region153: #{tpu_custom_call.1} parent=111 // pred_check
          %p1112 = pneg %p1111
        $region154: #{tpu_custom_call.1} parent=111 // pred_check_branch
          %1114 = sbr.rel (%p1112) target = $region156
        $region155: #{tpu_custom_call.1} parent=111 // pred_region
          %v1115 = vld [vmem:[#allocation4] sm:$0xff]
          %v1116 = vld [vmem:[#allocation4 + $0x8] sm:$0xff]
          %v1117 = vld [vmem:[#allocation7] sm:$0xff]
          %v1118 = vld [vmem:[#allocation7 + $0x8] sm:$0xff]
          %v1119 = vadd.f32 %v1115, %v1117
          %v1120 = vadd.f32 %v1116, %v1118
          %v1121 = vld [vmem:[#allocation10] sm:$0x1]
          %v1122 = vld [vmem:[#allocation12] sm:$0x1]
          %vm1123 = vcmask 261120
          %v1124 = vsel %vm1123, %v1119, 0.0
          %1125 = vadd.xlane.f32.xlu0 %v1124
          %v1126 = vpop.xlane.xlu0 %1125
          %v1127 = vsel %vm1123, %v1120, 0.0
          %1128 = vadd.xlane.f32.xlu0 %v1127
          %v1129 = vpop.xlane.xlu0 %1128
          %v1130 = vmul.f32 %v1119, %v1119
          %v1131 = vmul.f32 %v1120, %v1120
          %v1132 = vsel %vm1123, %v1130, 0.0
          %1133 = vadd.xlane.f32.xlu0 %v1132
          %v1134 = vpop.xlane.xlu0 %1133
          %v1135 = vsel %vm1123, %v1131, 0.0
          %1136 = vadd.xlane.f32.xlu0 %v1135
          %v1137 = vpop.xlane.xlu0 %1136
          %v1138 = vmul.f32 %v1126, 0.03125
          %v1139 = vmul.f32 %v1129, 0.03125
          %v1140 = vmul.f32 %v1134, 0.03125
          %v1141 = vmul.f32 %v1137, 0.03125
          %v1142 = vmul.f32 %v1138, %v1138
          %v1143 = vmul.f32 %v1139, %v1139
          %v1144 = vsub.f32 %v1140, %v1142
          %v1145 = vsub.f32 %v1141, %v1143
          %v1146 = vsub.f32 %v1119, %v1138
          %v1147 = vsub.f32 %v1120, %v1139
          %v1148 = vadd.f32 %v1144, 1e-12
          %v1149 = vadd.f32 %v1145, 1e-12
          %v1150 = vrsqrt.pop %v1148
          %v1151 = vmul.f32 %v1150, %v1148
          %v1152 = vmul.f32 %v1151, %v1150
          %v1153 = vmul.f32 0.5, %v1152
          %v1154 = vsub.f32 1.5, %v1153
          %v1155 = vmul.f32 %v1150, %v1154
          %vm1156 = vweird.f32 %v1148
          %vm1157 = vweird.f32 %v1150
          %vm1158 = vmor %vm1156, %vm1157
          %v1159 = vsel %vm1158, %v1150, %v1155
          %v1160 = vrsqrt.pop %v1149
          %v1161 = vmul.f32 %v1160, %v1149
          %v1162 = vmul.f32 %v1161, %v1160
          %v1163 = vmul.f32 0.5, %v1162
          %v1164 = vsub.f32 1.5, %v1163
          %v1165 = vmul.f32 %v1160, %v1164
          %vm1166 = vweird.f32 %v1149
          %vm1167 = vweird.f32 %v1160
          %vm1168 = vmor %vm1166, %vm1167
          %v1169 = vsel %vm1168, %v1160, %v1165
          %v1170 = vmul.f32 %v1146, %v1159
          %v1171 = vmul.f32 %v1147, %v1169
          %v1173 = vperm.slane %v1121, 0
          %v1175 = vmul.f32 %v1170, %v1173
          %v1176 = vmul.f32 %v1171, %v1173
          %v1178 = vperm.slane %v1122, 0
          %v1180 = vadd.f32 %v1175, %v1178
          %v1181 = vadd.f32 %v1176, %v1178
          %1182 = vst.msk [vmem:[#allocation2] sm:$0xff] %vm1123, %v1180
          %1183 = vst.msk [vmem:[#allocation2 + $0x8] sm:$0xff] %vm1123, %v1181
        $region156: #{tpu_custom_call.1} parent=111 // pred_fallthru
          _
        %v1184 = vld [vmem:[#allocation2] sm:$0xff]
        %v1185 = vld [vmem:[#allocation2 + $0x8] sm:$0xff]
        %v1186 = vld [vmem:[#allocation9] sm:$0x3]
        %v1187 = vsub.f32 %v1186, 1.0
        %v1188 = vmul.f32 %v1187, 1e+09
        %v1189 = vld [vmem:[%s1071] sm:$0xff]
        %v1190 = vld [vmem:[%s1071 + $0x8] sm:$0xff]
        %v1191 = vld [vmem:[%s1071 + $0x10] sm:$0xff]
        %v1192 = vld [vmem:[%s1071 + $0x18] sm:$0xff]
        %v1193 = vld [vmem:[%s1074] sm:$0x1]
        %v1195 = vperm.slane %v1193, 0
        %vm1197 = vcmask 261120
        %v1199 = vsel %vm1197, %v1184, 0
        %v1202 = vsel %vm1197, %v1185, 0
        %1204 = vmatpush.msra.mxu0 0.0
        %1205 = vmatpush.msra.mxu0 0.0
        %1206 = vmatpush.msra.mxu0 0.0
        %1207 = vmatpush.msra.mxu0 0.0
        %1208 = vmatpush.msra.mxu0 0.0
        %1209 = vmatpush.msra.mxu0 0.0
        %1210 = vmatpush.msra.mxu0 0.0
        %1211 = vmatpush.msra.mxu0 0.0
        %1212 = vmatpush.msra.mxu0 0.0
        %1213 = vmatpush.msra.mxu0 0.0
        %1214 = vmatpush.msra.mxu0 0.0
        %1215 = vmatpush.msra.mxu0 0.0
        %1216 = vmatpush.msra.mxu0 %v1192
        %1217 = vmatpush.msra.mxu0 %v1191
        %1218 = vmatpush.msra.mxu0 %v1190
        %1219 = vmatpush.msra.mxu0 %v1189
        %1220 = vmatmul.f32.gmra.mxu0 %v1199
        %v1221 = vpop.f32.mrf.mxu0
        %v1222 = vadd.f32 %v1195, %v1221
        %1223 = vmatmul.f32.gmra.mxu0 %v1202
        %v1224 = vpop.f32.mrf.mxu0
        %v1225 = vadd.f32 %v1195, %v1224
        %1226 = vdwg.mxu0
        %v1227 = vld [vmem:[%s1079] sm:$0xff]
        %v1228 = vld [vmem:[%s1079 + $0x8] sm:$0xff]
        %v1229 = vld [vmem:[%s1079 + $0x10] sm:$0xff]
        %v1230 = vld [vmem:[%s1079 + $0x18] sm:$0xff]
        %v1231 = vld [vmem:[%s1082] sm:$0x1]
        %v1233 = vperm.slane %v1231, 0
        %1235 = vmatpush.msra.mxu0 0.0
        %1236 = vmatpush.msra.mxu0 0.0
        %1237 = vmatpush.msra.mxu0 0.0
        %1238 = vmatpush.msra.mxu0 0.0
        %1239 = vmatpush.msra.mxu0 0.0
        %1240 = vmatpush.msra.mxu0 0.0
        %1241 = vmatpush.msra.mxu0 0.0
        %1242 = vmatpush.msra.mxu0 0.0
        %1243 = vmatpush.msra.mxu0 0.0
        %1244 = vmatpush.msra.mxu0 0.0
        %1245 = vmatpush.msra.mxu0 0.0
        %1246 = vmatpush.msra.mxu0 0.0
        %1247 = vmatpush.msra.mxu0 %v1230
        %1248 = vmatpush.msra.mxu0 %v1229
        %1249 = vmatpush.msra.mxu0 %v1228
        %1250 = vmatpush.msra.mxu0 %v1227
        %1251 = vmatmul.f32.gmra.mxu0 %v1199
        %v1252 = vpop.f32.mrf.mxu0
        %v1253 = vadd.f32 %v1233, %v1252
        %1254 = vmatmul.f32.gmra.mxu0 %v1202
        %v1255 = vpop.f32.mrf.mxu0
        %v1256 = vadd.f32 %v1233, %v1255
        %1257 = vdwg.mxu0
        %v1258 = vld [vmem:[%s1087] sm:$0xff]
        %v1259 = vld [vmem:[%s1087 + $0x8] sm:$0xff]
        %v1260 = vld [vmem:[%s1087 + $0x10] sm:$0xff]
        %v1261 = vld [vmem:[%s1087 + $0x18] sm:$0xff]
        %v1262 = vld [vmem:[%s1090] sm:$0x1]
        %v1264 = vperm.slane %v1262, 0
        %1266 = vmatpush.msra.mxu0 0.0
        %1267 = vmatpush.msra.mxu0 0.0
        %1268 = vmatpush.msra.mxu0 0.0
        %1269 = vmatpush.msra.mxu0 0.0
        %1270 = vmatpush.msra.mxu0 0.0
        %1271 = vmatpush.msra.mxu0 0.0
        %1272 = vmatpush.msra.mxu0 0.0
        %1273 = vmatpush.msra.mxu0 0.0
        %1274 = vmatpush.msra.mxu0 0.0
        %1275 = vmatpush.msra.mxu0 0.0
        %1276 = vmatpush.msra.mxu0 0.0
        %1277 = vmatpush.msra.mxu0 0.0
        %1278 = vmatpush.msra.mxu0 %v1261
        %1279 = vmatpush.msra.mxu0 %v1260
        %1280 = vmatpush.msra.mxu0 %v1259
        %1281 = vmatpush.msra.mxu0 %v1258
        %1282 = vmatmul.f32.gmra.mxu0 %v1199
        %v1283 = vpop.f32.mrf.mxu0
        %v1284 = vadd.f32 %v1264, %v1283
        %1285 = vmatmul.f32.gmra.mxu0 %v1202
        %v1286 = vpop.f32.mrf.mxu0
        %v1287 = vadd.f32 %v1264, %v1286
        %1288 = vdwg.mxu0
        %v1289 = vperm.slane %v1188, 0
        %vm1290 = vcmask 64512
        %v1292 = vsel %vm1290, %v1222, 0
        %v1295 = vsel %vm1290, %v1253, 0
        %1297 = vmatpush.xpose.msra.mxu0 0.0
        %1298 = vmatpush.xpose.msra.mxu0 0.0
        %1299 = vmatpush.xpose.msra.mxu0 0.0
        %1300 = vmatpush.xpose.msra.mxu0 0.0
        %1301 = vmatpush.xpose.msra.mxu0 0.0
        %1302 = vmatpush.xpose.msra.mxu0 0.0
        %1303 = vmatpush.xpose.msra.mxu0 0.0
        %1304 = vmatpush.xpose.msra.mxu0 0.0
        %1305 = vmatpush.xpose.msra.mxu0 0.0
        %1306 = vmatpush.xpose.msra.mxu0 0.0
        %1307 = vmatpush.xpose.msra.mxu0 0.0
        %1308 = vmatpush.xpose.msra.mxu0 0.0
        %1309 = vmatpush.xpose.msra.mxu0 0.0
        %1310 = vmatpush.xpose.msra.mxu0 0.0
        %1311 = vmatpush.xpose.msra.mxu0 0.0
        %1312 = vmatpush.xpose.msra.mxu0 %v1295
        %1313 = vmatmul.f32.gmra.mxu0 %v1292
        %v1314 = vpop.f32.mrf.mxu0
        %v1315 = vadd.f32 %v1289, %v1314
        %1316 = vdwg.mxu0
        %v1317 = vsel %vm1290, %v1315, -inf
        %1318 = vmax.xlane.f32.xlu0 %v1317
        %v1319 = vpop.xlane.xlu0 %1318
        %v1320 = vsub.f32 %v1315, %v1319
        %v1321 = vmul.f32 %v1320, 1.442695
        %v1322 = vpow.pop %v1321
        %v1323 = vsel %vm1290, %v1322, 0.0
        %1324 = vadd.xlane.f32.xlu0 %v1323
        %v1325 = vpop.xlane.xlu0 %1324
        %v1326 = vrcp.pop %v1325
        %v1327 = vmul.f32 %v1322, %v1326
        %v1329 = vsel %vm1290, %v1327, 0
        %1331 = vmatpush.msra.mxu0 0.0
        %1332 = vmatpush.msra.mxu0 0.0
        %1333 = vmatpush.msra.mxu0 0.0
        %1334 = vmatpush.msra.mxu0 0.0
        %1335 = vmatpush.msra.mxu0 0.0
        %1336 = vmatpush.msra.mxu0 0.0
        %1337 = vmatpush.msra.mxu0 0.0
        %1338 = vmatpush.msra.mxu0 0.0
        %1339 = vmatpush.msra.mxu0 0.0
        %1340 = vmatpush.msra.mxu0 0.0
        %1341 = vmatpush.msra.mxu0 0.0
        %1342 = vmatpush.msra.mxu0 0.0
        %1343 = vmatpush.msra.mxu0 0.0
        %1344 = vmatpush.msra.mxu0 0.0
        %1345 = vmatpush.msra.mxu0 0.0
        %1346 = vmatpush.msra.mxu0 %v1284
        %1347 = vmatmul.f32.gmra.mxu0 %v1329
        %v1348 = vpop.f32.mrf.mxu0
        %v1349 = vadd.f32 0.0, %v1348
        %1350 = vdwg.mxu0
        %1351 = vst.msk [vmem:[#allocation3] sm:$0xff] %vm1290, %v1349
        %1352 = vrot.lane.b32.xlu0 %v1222, 120
        %v1353 = vpop.permute.xlu0 %1352
        %1354 = vrot.lane.b32.xlu0 %v1253, 120
        %v1355 = vpop.permute.xlu0 %1354
        %v1356 = vsel %vm1290, %v1353, 0
        %v1358 = vsel %vm1290, %v1355, 0
        %1360 = vmatpush.xpose.msra.mxu0 0.0
        %1361 = vmatpush.xpose.msra.mxu0 0.0
        %1362 = vmatpush.xpose.msra.mxu0 0.0
        %1363 = vmatpush.xpose.msra.mxu0 0.0
        %1364 = vmatpush.xpose.msra.mxu0 0.0
        %1365 = vmatpush.xpose.msra.mxu0 0.0
        %1366 = vmatpush.xpose.msra.mxu0 0.0
        %1367 = vmatpush.xpose.msra.mxu0 0.0
        %1368 = vmatpush.xpose.msra.mxu0 0.0
        %1369 = vmatpush.xpose.msra.mxu0 0.0
        %1370 = vmatpush.xpose.msra.mxu0 0.0
        %1371 = vmatpush.xpose.msra.mxu0 0.0
        %1372 = vmatpush.xpose.msra.mxu0 0.0
        %1373 = vmatpush.xpose.msra.mxu0 0.0
        %1374 = vmatpush.xpose.msra.mxu0 0.0
        %1375 = vmatpush.xpose.msra.mxu0 %v1358
        %1376 = vmatmul.f32.gmra.mxu0 %v1356
        %v1377 = vpop.f32.mrf.mxu0
        %v1378 = vadd.f32 %v1289, %v1377
        %1379 = vdwg.mxu0
        %v1380 = vsel %vm1290, %v1378, -inf
        %1381 = vmax.xlane.f32.xlu0 %v1380
        %v1382 = vpop.xlane.xlu0 %1381
        %v1383 = vsub.f32 %v1378, %v1382
        %v1384 = vmul.f32 %v1383, 1.442695
        %v1385 = vpow.pop %v1384
        %v1386 = vsel %vm1290, %v1385, 0.0
        %1387 = vadd.xlane.f32.xlu0 %v1386
        %v1388 = vpop.xlane.xlu0 %1387
        %v1389 = vrcp.pop %v1388
        %v1390 = vmul.f32 %v1385, %v1389
        %1392 = vrot.lane.b32.xlu0 %v1284, 120
        %v1393 = vpop.permute.xlu0 %1392
        %v1396 = vsel %vm1290, %v1390, 0
        %1398 = vmatpush.msra.mxu0 0.0
        %1399 = vmatpush.msra.mxu0 0.0
        %1400 = vmatpush.msra.mxu0 0.0
        %1401 = vmatpush.msra.mxu0 0.0
        %1402 = vmatpush.msra.mxu0 0.0
        %1403 = vmatpush.msra.mxu0 0.0
        %1404 = vmatpush.msra.mxu0 0.0
        %1405 = vmatpush.msra.mxu0 0.0
        %1406 = vmatpush.msra.mxu0 0.0
        %1407 = vmatpush.msra.mxu0 0.0
        %1408 = vmatpush.msra.mxu0 0.0
        %1409 = vmatpush.msra.mxu0 0.0
        %1410 = vmatpush.msra.mxu0 0.0
        %1411 = vmatpush.msra.mxu0 0.0
        %1412 = vmatpush.msra.mxu0 0.0
        %1413 = vmatpush.msra.mxu0 %v1393
        %1414 = vmatmul.f32.gmra.mxu0 %v1396
        %v1415 = vpop.f32.mrf.mxu0
        %v1416 = vadd.f32 0.0, %v1415
        %1417 = vdwg.mxu0
        %1419 = vrot.lane.b32.xlu0 %v1416, 8
        %v1420 = vpop.permute.xlu0 %1419
        %vm1422 = vcmask 130112
        %1423 = vst.msk [vmem:[#allocation3] sm:$0xff] %vm1422, %v1420
        %1424 = vrot.lane.b32.xlu0 %v1222, 112
        %v1425 = vpop.permute.xlu0 %1424
        %1426 = vrot.lane.b32.xlu0 %v1253, 112
        %v1427 = vpop.permute.xlu0 %1426
        %v1428 = vsel %vm1290, %v1425, 0
        %v1430 = vsel %vm1290, %v1427, 0
        %1432 = vmatpush.xpose.msra.mxu0 0.0
        %1433 = vmatpush.xpose.msra.mxu0 0.0
        %1434 = vmatpush.xpose.msra.mxu0 0.0
        %1435 = vmatpush.xpose.msra.mxu0 0.0
        %1436 = vmatpush.xpose.msra.mxu0 0.0
        %1437 = vmatpush.xpose.msra.mxu0 0.0
        %1438 = vmatpush.xpose.msra.mxu0 0.0
        %1439 = vmatpush.xpose.msra.mxu0 0.0
        %1440 = vmatpush.xpose.msra.mxu0 0.0
        %1441 = vmatpush.xpose.msra.mxu0 0.0
        %1442 = vmatpush.xpose.msra.mxu0 0.0
        %1443 = vmatpush.xpose.msra.mxu0 0.0
        %1444 = vmatpush.xpose.msra.mxu0 0.0
        %1445 = vmatpush.xpose.msra.mxu0 0.0
        %1446 = vmatpush.xpose.msra.mxu0 0.0
        %1447 = vmatpush.xpose.msra.mxu0 %v1430
        %1448 = vmatmul.f32.gmra.mxu0 %v1428
        %v1449 = vpop.f32.mrf.mxu0
        %v1450 = vadd.f32 %v1289, %v1449
        %1451 = vdwg.mxu0
        %v1452 = vsel %vm1290, %v1450, -inf
        %1453 = vmax.xlane.f32.xlu0 %v1452
        %v1454 = vpop.xlane.xlu0 %1453
        %v1455 = vsub.f32 %v1450, %v1454
        %v1456 = vmul.f32 %v1455, 1.442695
        %v1457 = vpow.pop %v1456
        %v1458 = vsel %vm1290, %v1457, 0.0
        %1459 = vadd.xlane.f32.xlu0 %v1458
        %v1460 = vpop.xlane.xlu0 %1459
        %v1461 = vrcp.pop %v1460
        %v1462 = vmul.f32 %v1457, %v1461
        %1463 = vrot.lane.b32.xlu0 %v1284, 112
        %v1464 = vpop.permute.xlu0 %1463
        %v1467 = vsel %vm1290, %v1462, 0
        %1469 = vmatpush.msra.mxu0 0.0
        %1470 = vmatpush.msra.mxu0 0.0
        %1471 = vmatpush.msra.mxu0 0.0
        %1472 = vmatpush.msra.mxu0 0.0
        %1473 = vmatpush.msra.mxu0 0.0
        %1474 = vmatpush.msra.mxu0 0.0
        %1475 = vmatpush.msra.mxu0 0.0
        %1476 = vmatpush.msra.mxu0 0.0
        %1477 = vmatpush.msra.mxu0 0.0
        %1478 = vmatpush.msra.mxu0 0.0
        %1479 = vmatpush.msra.mxu0 0.0
        %1480 = vmatpush.msra.mxu0 0.0
        %1481 = vmatpush.msra.mxu0 0.0
        %1482 = vmatpush.msra.mxu0 0.0
        %1483 = vmatpush.msra.mxu0 0.0
        %1484 = vmatpush.msra.mxu0 %v1464
        %1485 = vmatmul.f32.gmra.mxu0 %v1467
        %v1486 = vpop.f32.mrf.mxu0
        %v1487 = vadd.f32 0.0, %v1486
        %1488 = vdwg.mxu0
        %1490 = vrot.lane.b32.xlu0 %v1487, 16
        %v1491 = vpop.permute.xlu0 %1490
        %vm1493 = vcmask 195712
        %1494 = vst.msk [vmem:[#allocation3] sm:$0xff] %vm1493, %v1491
        %1495 = vrot.lane.b32.xlu0 %v1222, 104
        %v1496 = vpop.permute.xlu0 %1495
        %1497 = vrot.lane.b32.xlu0 %v1253, 104
        %v1498 = vpop.permute.xlu0 %1497
        %v1499 = vsel %vm1290, %v1496, 0
        %v1501 = vsel %vm1290, %v1498, 0
        %1503 = vmatpush.xpose.msra.mxu0 0.0
        %1504 = vmatpush.xpose.msra.mxu0 0.0
        %1505 = vmatpush.xpose.msra.mxu0 0.0
        %1506 = vmatpush.xpose.msra.mxu0 0.0
        %1507 = vmatpush.xpose.msra.mxu0 0.0
        %1508 = vmatpush.xpose.msra.mxu0 0.0
        %1509 = vmatpush.xpose.msra.mxu0 0.0
        %1510 = vmatpush.xpose.msra.mxu0 0.0
        %1511 = vmatpush.xpose.msra.mxu0 0.0
        %1512 = vmatpush.xpose.msra.mxu0 0.0
        %1513 = vmatpush.xpose.msra.mxu0 0.0
        %1514 = vmatpush.xpose.msra.mxu0 0.0
        %1515 = vmatpush.xpose.msra.mxu0 0.0
        %1516 = vmatpush.xpose.msra.mxu0 0.0
        %1517 = vmatpush.xpose.msra.mxu0 0.0
        %1518 = vmatpush.xpose.msra.mxu0 %v1501
        %1519 = vmatmul.f32.gmra.mxu0 %v1499
        %v1520 = vpop.f32.mrf.mxu0
        %v1521 = vadd.f32 %v1289, %v1520
        %1522 = vdwg.mxu0
        %v1523 = vsel %vm1290, %v1521, -inf
        %1524 = vmax.xlane.f32.xlu0 %v1523
        %v1525 = vpop.xlane.xlu0 %1524
        %v1526 = vsub.f32 %v1521, %v1525
        %v1527 = vmul.f32 %v1526, 1.442695
        %v1528 = vpow.pop %v1527
        %v1529 = vsel %vm1290, %v1528, 0.0
        %1530 = vadd.xlane.f32.xlu0 %v1529
        %v1531 = vpop.xlane.xlu0 %1530
        %v1532 = vrcp.pop %v1531
        %v1533 = vmul.f32 %v1528, %v1532
        %1534 = vrot.lane.b32.xlu0 %v1284, 104
        %v1535 = vpop.permute.xlu0 %1534
        %v1538 = vsel %vm1290, %v1533, 0
        %1540 = vmatpush.msra.mxu0 0.0
        %1541 = vmatpush.msra.mxu0 0.0
        %1542 = vmatpush.msra.mxu0 0.0
        %1543 = vmatpush.msra.mxu0 0.0
        %1544 = vmatpush.msra.mxu0 0.0
        %1545 = vmatpush.msra.mxu0 0.0
        %1546 = vmatpush.msra.mxu0 0.0
        %1547 = vmatpush.msra.mxu0 0.0
        %1548 = vmatpush.msra.mxu0 0.0
        %1549 = vmatpush.msra.mxu0 0.0
        %1550 = vmatpush.msra.mxu0 0.0
        %1551 = vmatpush.msra.mxu0 0.0
        %1552 = vmatpush.msra.mxu0 0.0
        %1553 = vmatpush.msra.mxu0 0.0
        %1554 = vmatpush.msra.mxu0 0.0
        %1555 = vmatpush.msra.mxu0 %v1535
        %1556 = vmatmul.f32.gmra.mxu0 %v1538
        %v1557 = vpop.f32.mrf.mxu0
        %v1558 = vadd.f32 0.0, %v1557
        %1559 = vdwg.mxu0
        %1561 = vrot.lane.b32.xlu0 %v1558, 24
        %v1562 = vpop.permute.xlu0 %1561
        %vm1564 = vcmask 261312
        %1565 = vst.msk [vmem:[#allocation3] sm:$0xff] %vm1564, %v1562
        %v1566 = vperm.slane %v1188, 1
        %v1568 = vsel %vm1290, %v1225, 0
        %v1571 = vsel %vm1290, %v1256, 0
        %1573 = vmatpush.xpose.msra.mxu0 0.0
        %1574 = vmatpush.xpose.msra.mxu0 0.0
        %1575 = vmatpush.xpose.msra.mxu0 0.0
        %1576 = vmatpush.xpose.msra.mxu0 0.0
        %1577 = vmatpush.xpose.msra.mxu0 0.0
        %1578 = vmatpush.xpose.msra.mxu0 0.0
        %1579 = vmatpush.xpose.msra.mxu0 0.0
        %1580 = vmatpush.xpose.msra.mxu0 0.0
        %1581 = vmatpush.xpose.msra.mxu0 0.0
        %1582 = vmatpush.xpose.msra.mxu0 0.0
        %1583 = vmatpush.xpose.msra.mxu0 0.0
        %1584 = vmatpush.xpose.msra.mxu0 0.0
        %1585 = vmatpush.xpose.msra.mxu0 0.0
        %1586 = vmatpush.xpose.msra.mxu0 0.0
        %1587 = vmatpush.xpose.msra.mxu0 0.0
        %1588 = vmatpush.xpose.msra.mxu0 %v1571
        %1589 = vmatmul.f32.gmra.mxu0 %v1568
        %v1590 = vpop.f32.mrf.mxu0
        %v1591 = vadd.f32 %v1566, %v1590
        %1592 = vdwg.mxu0
        %v1593 = vsel %vm1290, %v1591, -inf
        %1594 = vmax.xlane.f32.xlu0 %v1593
        %v1595 = vpop.xlane.xlu0 %1594
        %v1596 = vsub.f32 %v1591, %v1595
        %v1597 = vmul.f32 %v1596, 1.442695
        %v1598 = vpow.pop %v1597
        %v1599 = vsel %vm1290, %v1598, 0.0
        %1600 = vadd.xlane.f32.xlu0 %v1599
        %v1601 = vpop.xlane.xlu0 %1600
        %v1602 = vrcp.pop %v1601
        %v1603 = vmul.f32 %v1598, %v1602
        %v1605 = vsel %vm1290, %v1603, 0
        %1607 = vmatpush.msra.mxu0 0.0
        %1608 = vmatpush.msra.mxu0 0.0
        %1609 = vmatpush.msra.mxu0 0.0
        %1610 = vmatpush.msra.mxu0 0.0
        %1611 = vmatpush.msra.mxu0 0.0
        %1612 = vmatpush.msra.mxu0 0.0
        %1613 = vmatpush.msra.mxu0 0.0
        %1614 = vmatpush.msra.mxu0 0.0
        %1615 = vmatpush.msra.mxu0 0.0
        %1616 = vmatpush.msra.mxu0 0.0
        %1617 = vmatpush.msra.mxu0 0.0
        %1618 = vmatpush.msra.mxu0 0.0
        %1619 = vmatpush.msra.mxu0 0.0
        %1620 = vmatpush.msra.mxu0 0.0
        %1621 = vmatpush.msra.mxu0 0.0
        %1622 = vmatpush.msra.mxu0 %v1287
        %1623 = vmatmul.f32.gmra.mxu0 %v1605
        %v1624 = vpop.f32.mrf.mxu0
        %v1625 = vadd.f32 0.0, %v1624
        %1626 = vdwg.mxu0
        %1627 = vst.msk [vmem:[#allocation3 + $0x8] sm:$0xff] %vm1290, %v1625
        %1628 = vrot.lane.b32.xlu0 %v1225, 120
        %v1629 = vpop.permute.xlu0 %1628
        %1630 = vrot.lane.b32.xlu0 %v1256, 120
        %v1631 = vpop.permute.xlu0 %1630
        %v1632 = vsel %vm1290, %v1629, 0
        %v1634 = vsel %vm1290, %v1631, 0
        %1636 = vmatpush.xpose.msra.mxu0 0.0
        %1637 = vmatpush.xpose.msra.mxu0 0.0
        %1638 = vmatpush.xpose.msra.mxu0 0.0
        %1639 = vmatpush.xpose.msra.mxu0 0.0
        %1640 = vmatpush.xpose.msra.mxu0 0.0
        %1641 = vmatpush.xpose.msra.mxu0 0.0
        %1642 = vmatpush.xpose.msra.mxu0 0.0
        %1643 = vmatpush.xpose.msra.mxu0 0.0
        %1644 = vmatpush.xpose.msra.mxu0 0.0
        %1645 = vmatpush.xpose.msra.mxu0 0.0
        %1646 = vmatpush.xpose.msra.mxu0 0.0
        %1647 = vmatpush.xpose.msra.mxu0 0.0
        %1648 = vmatpush.xpose.msra.mxu0 0.0
        %1649 = vmatpush.xpose.msra.mxu0 0.0
        %1650 = vmatpush.xpose.msra.mxu0 0.0
        %1651 = vmatpush.xpose.msra.mxu0 %v1634
        %1652 = vmatmul.f32.gmra.mxu0 %v1632
        %v1653 = vpop.f32.mrf.mxu0
        %v1654 = vadd.f32 %v1566, %v1653
        %1655 = vdwg.mxu0
        %v1656 = vsel %vm1290, %v1654, -inf
        %1657 = vmax.xlane.f32.xlu0 %v1656
        %v1658 = vpop.xlane.xlu0 %1657
        %v1659 = vsub.f32 %v1654, %v1658
        %v1660 = vmul.f32 %v1659, 1.442695
        %v1661 = vpow.pop %v1660
        %v1662 = vsel %vm1290, %v1661, 0.0
        %1663 = vadd.xlane.f32.xlu0 %v1662
        %v1664 = vpop.xlane.xlu0 %1663
        %v1665 = vrcp.pop %v1664
        %v1666 = vmul.f32 %v1661, %v1665
        %1668 = vrot.lane.b32.xlu0 %v1287, 120
        %v1669 = vpop.permute.xlu0 %1668
        %v1672 = vsel %vm1290, %v1666, 0
        %1674 = vmatpush.msra.mxu0 0.0
        %1675 = vmatpush.msra.mxu0 0.0
        %1676 = vmatpush.msra.mxu0 0.0
        %1677 = vmatpush.msra.mxu0 0.0
        %1678 = vmatpush.msra.mxu0 0.0
        %1679 = vmatpush.msra.mxu0 0.0
        %1680 = vmatpush.msra.mxu0 0.0
        %1681 = vmatpush.msra.mxu0 0.0
        %1682 = vmatpush.msra.mxu0 0.0
        %1683 = vmatpush.msra.mxu0 0.0
        %1684 = vmatpush.msra.mxu0 0.0
        %1685 = vmatpush.msra.mxu0 0.0
        %1686 = vmatpush.msra.mxu0 0.0
        %1687 = vmatpush.msra.mxu0 0.0
        %1688 = vmatpush.msra.mxu0 0.0
        %1689 = vmatpush.msra.mxu0 %v1669
        %1690 = vmatmul.f32.gmra.mxu0 %v1672
        %v1691 = vpop.f32.mrf.mxu0
        %v1692 = vadd.f32 0.0, %v1691
        %1693 = vdwg.mxu0
        %1695 = vrot.lane.b32.xlu0 %v1692, 8
        %v1696 = vpop.permute.xlu0 %1695
        %1698 = vst.msk [vmem:[#allocation3 + $0x8] sm:$0xff] %vm1422, %v1696
        %1699 = vrot.lane.b32.xlu0 %v1225, 112
        %v1700 = vpop.permute.xlu0 %1699
        %1701 = vrot.lane.b32.xlu0 %v1256, 112
        %v1702 = vpop.permute.xlu0 %1701
        %v1703 = vsel %vm1290, %v1700, 0
        %v1705 = vsel %vm1290, %v1702, 0
        %1707 = vmatpush.xpose.msra.mxu0 0.0
        %1708 = vmatpush.xpose.msra.mxu0 0.0
        %1709 = vmatpush.xpose.msra.mxu0 0.0
        %1710 = vmatpush.xpose.msra.mxu0 0.0
        %1711 = vmatpush.xpose.msra.mxu0 0.0
        %1712 = vmatpush.xpose.msra.mxu0 0.0
        %1713 = vmatpush.xpose.msra.mxu0 0.0
        %1714 = vmatpush.xpose.msra.mxu0 0.0
        %1715 = vmatpush.xpose.msra.mxu0 0.0
        %1716 = vmatpush.xpose.msra.mxu0 0.0
        %1717 = vmatpush.xpose.msra.mxu0 0.0
        %1718 = vmatpush.xpose.msra.mxu0 0.0
        %1719 = vmatpush.xpose.msra.mxu0 0.0
        %1720 = vmatpush.xpose.msra.mxu0 0.0
        %1721 = vmatpush.xpose.msra.mxu0 0.0
        %1722 = vmatpush.xpose.msra.mxu0 %v1705
        %1723 = vmatmul.f32.gmra.mxu0 %v1703
        %v1724 = vpop.f32.mrf.mxu0
        %v1725 = vadd.f32 %v1566, %v1724
        %1726 = vdwg.mxu0
        %v1727 = vsel %vm1290, %v1725, -inf
        %1728 = vmax.xlane.f32.xlu0 %v1727
        %v1729 = vpop.xlane.xlu0 %1728
        %v1730 = vsub.f32 %v1725, %v1729
        %v1731 = vmul.f32 %v1730, 1.442695
        %v1732 = vpow.pop %v1731
        %v1733 = vsel %vm1290, %v1732, 0.0
        %1734 = vadd.xlane.f32.xlu0 %v1733
        %v1735 = vpop.xlane.xlu0 %1734
        %v1736 = vrcp.pop %v1735
        %v1737 = vmul.f32 %v1732, %v1736
        %1738 = vrot.lane.b32.xlu0 %v1287, 112
        %v1739 = vpop.permute.xlu0 %1738
        %v1742 = vsel %vm1290, %v1737, 0
        %1744 = vmatpush.msra.mxu0 0.0
        %1745 = vmatpush.msra.mxu0 0.0
        %1746 = vmatpush.msra.mxu0 0.0
        %1747 = vmatpush.msra.mxu0 0.0
        %1748 = vmatpush.msra.mxu0 0.0
        %1749 = vmatpush.msra.mxu0 0.0
        %1750 = vmatpush.msra.mxu0 0.0
        %1751 = vmatpush.msra.mxu0 0.0
        %1752 = vmatpush.msra.mxu0 0.0
        %1753 = vmatpush.msra.mxu0 0.0
        %1754 = vmatpush.msra.mxu0 0.0
        %1755 = vmatpush.msra.mxu0 0.0
        %1756 = vmatpush.msra.mxu0 0.0
        %1757 = vmatpush.msra.mxu0 0.0
        %1758 = vmatpush.msra.mxu0 0.0
        %1759 = vmatpush.msra.mxu0 %v1739
        %1760 = vmatmul.f32.gmra.mxu0 %v1742
        %v1761 = vpop.f32.mrf.mxu0
        %v1762 = vadd.f32 0.0, %v1761
        %1763 = vdwg.mxu0
        %1765 = vrot.lane.b32.xlu0 %v1762, 16
        %v1766 = vpop.permute.xlu0 %1765
        %1768 = vst.msk [vmem:[#allocation3 + $0x8] sm:$0xff] %vm1493, %v1766
        %1769 = vrot.lane.b32.xlu0 %v1225, 104
        %v1770 = vpop.permute.xlu0 %1769
        %1771 = vrot.lane.b32.xlu0 %v1256, 104
        %v1772 = vpop.permute.xlu0 %1771
        %v1773 = vsel %vm1290, %v1770, 0
        %v1775 = vsel %vm1290, %v1772, 0
        %1777 = vmatpush.xpose.msra.mxu0 0.0
        %1778 = vmatpush.xpose.msra.mxu0 0.0
        %1779 = vmatpush.xpose.msra.mxu0 0.0
        %1780 = vmatpush.xpose.msra.mxu0 0.0
        %1781 = vmatpush.xpose.msra.mxu0 0.0
        %1782 = vmatpush.xpose.msra.mxu0 0.0
        %1783 = vmatpush.xpose.msra.mxu0 0.0
        %1784 = vmatpush.xpose.msra.mxu0 0.0
        %1785 = vmatpush.xpose.msra.mxu0 0.0
        %1786 = vmatpush.xpose.msra.mxu0 0.0
        %1787 = vmatpush.xpose.msra.mxu0 0.0
        %1788 = vmatpush.xpose.msra.mxu0 0.0
        %1789 = vmatpush.xpose.msra.mxu0 0.0
        %1790 = vmatpush.xpose.msra.mxu0 0.0
        %1791 = vmatpush.xpose.msra.mxu0 0.0
        %1792 = vmatpush.xpose.msra.mxu0 %v1775
        %1793 = vmatmul.f32.gmra.mxu0 %v1773
        %v1794 = vpop.f32.mrf.mxu0
        %v1795 = vadd.f32 %v1566, %v1794
        %1796 = vdwg.mxu0
        %v1797 = vsel %vm1290, %v1795, -inf
        %1798 = vmax.xlane.f32.xlu0 %v1797
        %v1799 = vpop.xlane.xlu0 %1798
        %v1800 = vsub.f32 %v1795, %v1799
        %v1801 = vmul.f32 %v1800, 1.442695
        %v1802 = vpow.pop %v1801
        %v1803 = vsel %vm1290, %v1802, 0.0
        %1804 = vadd.xlane.f32.xlu0 %v1803
        %v1805 = vpop.xlane.xlu0 %1804
        %v1806 = vrcp.pop %v1805
        %v1807 = vmul.f32 %v1802, %v1806
        %1808 = vrot.lane.b32.xlu0 %v1287, 104
        %v1809 = vpop.permute.xlu0 %1808
        %v1812 = vsel %vm1290, %v1807, 0
        %1814 = vmatpush.msra.mxu0 0.0
        %1815 = vmatpush.msra.mxu0 0.0
        %1816 = vmatpush.msra.mxu0 0.0
        %1817 = vmatpush.msra.mxu0 0.0
        %1818 = vmatpush.msra.mxu0 0.0
        %1819 = vmatpush.msra.mxu0 0.0
        %1820 = vmatpush.msra.mxu0 0.0
        %1821 = vmatpush.msra.mxu0 0.0
        %1822 = vmatpush.msra.mxu0 0.0
        %1823 = vmatpush.msra.mxu0 0.0
        %1824 = vmatpush.msra.mxu0 0.0
        %1825 = vmatpush.msra.mxu0 0.0
        %1826 = vmatpush.msra.mxu0 0.0
        %1827 = vmatpush.msra.mxu0 0.0
        %1828 = vmatpush.msra.mxu0 0.0
        %1829 = vmatpush.msra.mxu0 %v1809
        %1830 = vmatmul.f32.gmra.mxu0 %v1812
        %v1831 = vpop.f32.mrf.mxu0
        %v1832 = vadd.f32 0.0, %v1831
        %1833 = vdwg.mxu0
        %1835 = vrot.lane.b32.xlu0 %v1832, 24
        %v1836 = vpop.permute.xlu0 %1835
        %1838 = vst.msk [vmem:[#allocation3 + $0x8] sm:$0xff] %vm1564, %v1836
        %v1839 = vld [vmem:[#allocation3] sm:$0xff]
        %v1840 = vld [vmem:[#allocation3 + $0x8] sm:$0xff]
        %v1841 = vld [vmem:[%s918] sm:$0xff]
        %v1842 = vld [vmem:[%s918 + $0x8] sm:$0xff]
        %v1843 = vld [vmem:[%s918 + $0x10] sm:$0xff]
        %v1844 = vld [vmem:[%s918 + $0x18] sm:$0xff]
        %v1845 = vld [vmem:[%s1093] sm:$0x1]
        %v1847 = vperm.slane %v1845, 0
        %v1850 = vsel %vm1197, %v1839, 0
        %v1853 = vsel %vm1197, %v1840, 0
        %1855 = vmatpush.msra.mxu0 0.0
        %1856 = vmatpush.msra.mxu0 0.0
        %1857 = vmatpush.msra.mxu0 0.0
        %1858 = vmatpush.msra.mxu0 0.0
        %1859 = vmatpush.msra.mxu0 0.0
        %1860 = vmatpush.msra.mxu0 0.0
        %1861 = vmatpush.msra.mxu0 0.0
        %1862 = vmatpush.msra.mxu0 0.0
        %1863 = vmatpush.msra.mxu0 0.0
        %1864 = vmatpush.msra.mxu0 0.0
        %1865 = vmatpush.msra.mxu0 0.0
        %1866 = vmatpush.msra.mxu0 0.0
        %1867 = vmatpush.msra.mxu0 %v1844
        %1868 = vmatpush.msra.mxu0 %v1843
        %1869 = vmatpush.msra.mxu0 %v1842
        %1870 = vmatpush.msra.mxu0 %v1841
        %1871 = vmatmul.f32.gmra.mxu0 %v1850
        %v1872 = vpop.f32.mrf.mxu0
        %v1873 = vadd.f32 %v1847, %v1872
        %1874 = vmatmul.f32.gmra.mxu0 %v1853
        %v1875 = vpop.f32.mrf.mxu0
        %v1876 = vadd.f32 %v1847, %v1875
        %1877 = vdwg.mxu0
        %v1878 = vadd.f32 %v1184, %v1873
        %v1879 = vadd.f32 %v1185, %v1876
        %v1880 = vld [vmem:[%s1096] sm:$0x1]
        %v1881 = vld [vmem:[%s927] sm:$0x1]
        %v1882 = vsel %vm1197, %v1878, 0.0
        %1883 = vadd.xlane.f32.xlu0 %v1882
        %v1884 = vpop.xlane.xlu0 %1883
        %v1885 = vsel %vm1197, %v1879, 0.0
        %1886 = vadd.xlane.f32.xlu0 %v1885
        %v1887 = vpop.xlane.xlu0 %1886
        %v1888 = vmul.f32 %v1878, %v1878
        %v1889 = vmul.f32 %v1879, %v1879
        %v1890 = vsel %vm1197, %v1888, 0.0
        %1891 = vadd.xlane.f32.xlu0 %v1890
        %v1892 = vpop.xlane.xlu0 %1891
        %v1893 = vsel %vm1197, %v1889, 0.0
        %1894 = vadd.xlane.f32.xlu0 %v1893
        %v1895 = vpop.xlane.xlu0 %1894
        %v1896 = vmul.f32 %v1884, 0.03125
        %v1897 = vmul.f32 %v1887, 0.03125
        %v1898 = vmul.f32 %v1892, 0.03125
        %v1899 = vmul.f32 %v1895, 0.03125
        %v1900 = vmul.f32 %v1896, %v1896
        %v1901 = vmul.f32 %v1897, %v1897
        %v1902 = vsub.f32 %v1898, %v1900
        %v1903 = vsub.f32 %v1899, %v1901
        %v1904 = vsub.f32 %v1878, %v1896
        %v1905 = vsub.f32 %v1879, %v1897
        %v1906 = vadd.f32 %v1902, 1e-12
        %v1907 = vadd.f32 %v1903, 1e-12
        %v1908 = vrsqrt.pop %v1906
        %v1909 = vmul.f32 %v1908, %v1906
        %v1910 = vmul.f32 %v1909, %v1908
        %v1911 = vmul.f32 0.5, %v1910
        %v1912 = vsub.f32 1.5, %v1911
        %v1913 = vmul.f32 %v1908, %v1912
        %vm1914 = vweird.f32 %v1906
        %vm1915 = vweird.f32 %v1908
        %vm1916 = vmor %vm1914, %vm1915
        %v1917 = vsel %vm1916, %v1908, %v1913
        %v1918 = vrsqrt.pop %v1907
        %v1919 = vmul.f32 %v1918, %v1907
        %v1920 = vmul.f32 %v1919, %v1918
        %v1921 = vmul.f32 0.5, %v1920
        %v1922 = vsub.f32 1.5, %v1921
        %v1923 = vmul.f32 %v1918, %v1922
        %vm1924 = vweird.f32 %v1907
        %vm1925 = vweird.f32 %v1918
        %vm1926 = vmor %vm1924, %vm1925
        %v1927 = vsel %vm1926, %v1918, %v1923
        %v1928 = vmul.f32 %v1904, %v1917
        %v1929 = vmul.f32 %v1905, %v1927
        %v1931 = vperm.slane %v1880, 0
        %v1933 = vmul.f32 %v1928, %v1931
        %v1934 = vmul.f32 %v1929, %v1931
        %v1936 = vperm.slane %v1881, 0
        %v1938 = vadd.f32 %v1933, %v1936
        %v1939 = vadd.f32 %v1934, %v1936
        %v1940 = vld [vmem:[%s937] sm:$0xff]
        %v1941 = vld [vmem:[%s937 + $0x8] sm:$0xff]
        %v1942 = vld [vmem:[%s937 + $0x10] sm:$0xff]
        %v1943 = vld [vmem:[%s937 + $0x18] sm:$0xff]
        %v1944 = vld [vmem:[%s1099] sm:$0x1]
        %v1946 = vperm.slane %v1944, 0
        %v1949 = vsel %vm1197, %v1938, 0
        %v1952 = vsel %vm1197, %v1939, 0
        %1954 = vmatpush.msra.mxu0 0.0
        %1955 = vmatpush.msra.mxu0 0.0
        %1956 = vmatpush.msra.mxu0 0.0
        %1957 = vmatpush.msra.mxu0 0.0
        %1958 = vmatpush.msra.mxu0 0.0
        %1959 = vmatpush.msra.mxu0 0.0
        %1960 = vmatpush.msra.mxu0 0.0
        %1961 = vmatpush.msra.mxu0 0.0
        %1962 = vmatpush.msra.mxu0 0.0
        %1963 = vmatpush.msra.mxu0 0.0
        %1964 = vmatpush.msra.mxu0 0.0
        %1965 = vmatpush.msra.mxu0 0.0
        %1966 = vmatpush.msra.mxu0 %v1943
        %1967 = vmatpush.msra.mxu0 %v1942
        %1968 = vmatpush.msra.mxu0 %v1941
        %1969 = vmatpush.msra.mxu0 %v1940
        %1970 = vmatmul.f32.gmra.mxu0 %v1949
        %v1971 = vpop.f32.mrf.mxu0
        %v1972 = vadd.f32 %v1946, %v1971
        %1973 = vmatmul.f32.gmra.mxu0 %v1952
        %v1974 = vpop.f32.mrf.mxu0
        %v1975 = vadd.f32 %v1946, %v1974
        %1976 = vdwg.mxu0
        %v1977 = vmul.f32 %v1972, %v1972
        %v1978 = vmul.f32 %v1975, %v1975
        %v1979 = vmul.f32 %v1972, %v1977
        %v1980 = vmul.f32 %v1975, %v1978
        %v1981 = vmul.f32 %v1979, 0.044715
        %v1982 = vmul.f32 %v1980, 0.044715
        %v1983 = vadd.f32 %v1972, %v1981
        %v1984 = vadd.f32 %v1975, %v1982
        %v1985 = vmul.f32 %v1983, 0.7978846
        %v1986 = vmul.f32 %v1984, 0.7978846
        %v1987 = vtanh.pop %v1985
        %v1988 = vtanh.pop %v1986
        %v1989 = vadd.f32 %v1987, 1.0
        %v1990 = vadd.f32 %v1988, 1.0
        %v1991 = vmul.f32 %v1989, 0.5
        %v1992 = vmul.f32 %v1990, 0.5
        %v1993 = vmul.f32 %v1972, %v1991
        %v1994 = vmul.f32 %v1975, %v1992
        %v1995 = vld [vmem:[%s1104] sm:$0xff]
        %v1996 = vld [vmem:[%s1104 + $0x8] sm:$0xff]
        %v1997 = vld [vmem:[%s1104 + $0x10] sm:$0xff]
        %v1998 = vld [vmem:[%s1104 + $0x18] sm:$0xff]
        %v1999 = vld [vmem:[%s1104 + $0x20] sm:$0xff]
        %v2000 = vld [vmem:[%s1104 + $0x28] sm:$0xff]
        %v2001 = vld [vmem:[%s1104 + $0x30] sm:$0xff]
        %v2002 = vld [vmem:[%s1104 + $0x38] sm:$0xff]
        %v2003 = vld [vmem:[%s1107] sm:$0x1]
        %v2005 = vperm.slane %v2003, 0
        %vm2007 = vcmask 523264
        %v2009 = vsel %vm2007, %v1993, 0
        %v2012 = vsel %vm2007, %v1994, 0
        %2014 = vmatpush.msra.mxu0 0.0
        %2015 = vmatpush.msra.mxu0 0.0
        %2016 = vmatpush.msra.mxu0 0.0
        %2017 = vmatpush.msra.mxu0 0.0
        %2018 = vmatpush.msra.mxu0 0.0
        %2019 = vmatpush.msra.mxu0 0.0
        %2020 = vmatpush.msra.mxu0 0.0
        %2021 = vmatpush.msra.mxu0 0.0
        %2022 = vmatpush.msra.mxu0 %v2002
        %2023 = vmatpush.msra.mxu0 %v2001
        %2024 = vmatpush.msra.mxu0 %v2000
        %2025 = vmatpush.msra.mxu0 %v1999
        %2026 = vmatpush.msra.mxu0 %v1998
        %2027 = vmatpush.msra.mxu0 %v1997
        %2028 = vmatpush.msra.mxu0 %v1996
        %2029 = vmatpush.msra.mxu0 %v1995
        %2030 = vmatmul.f32.gmra.mxu0 %v2009
        %v2031 = vpop.f32.mrf.mxu0
        %v2032 = vadd.f32 %v2005, %v2031
        %2033 = vmatmul.f32.gmra.mxu0 %v2012
        %v2034 = vpop.f32.mrf.mxu0
        %v2035 = vadd.f32 %v2005, %v2034
        %2036 = vdwg.mxu0
        %v2037 = vadd.f32 %v1938, %v2032
        %v2038 = vadd.f32 %v1939, %v2035
        %v2039 = vld [vmem:[%s1110] sm:$0x1]
        %v2040 = vld [vmem:[%s946] sm:$0x1]
        %v2041 = vsel %vm1197, %v2037, 0.0
        %2042 = vadd.xlane.f32.xlu0 %v2041
        %v2043 = vpop.xlane.xlu0 %2042
        %v2044 = vsel %vm1197, %v2038, 0.0
        %2045 = vadd.xlane.f32.xlu0 %v2044
        %v2046 = vpop.xlane.xlu0 %2045
        %v2047 = vmul.f32 %v2037, %v2037
        %v2048 = vmul.f32 %v2038, %v2038
        %v2049 = vsel %vm1197, %v2047, 0.0
        %2050 = vadd.xlane.f32.xlu0 %v2049
        %v2051 = vpop.xlane.xlu0 %2050
        %v2052 = vsel %vm1197, %v2048, 0.0
        %2053 = vadd.xlane.f32.xlu0 %v2052
        %v2054 = vpop.xlane.xlu0 %2053
        %v2055 = vmul.f32 %v2043, 0.03125
        %v2056 = vmul.f32 %v2046, 0.03125
        %v2057 = vmul.f32 %v2051, 0.03125
        %v2058 = vmul.f32 %v2054, 0.03125
        %v2059 = vmul.f32 %v2055, %v2055
        %v2060 = vmul.f32 %v2056, %v2056
        %v2061 = vsub.f32 %v2057, %v2059
        %v2062 = vsub.f32 %v2058, %v2060
        %v2063 = vsub.f32 %v2037, %v2055
        %v2064 = vsub.f32 %v2038, %v2056
        %v2065 = vadd.f32 %v2061, 1e-12
        %v2066 = vadd.f32 %v2062, 1e-12
        %v2067 = vrsqrt.pop %v2065
        %v2068 = vmul.f32 %v2067, %v2065
        %v2069 = vmul.f32 %v2068, %v2067
        %v2070 = vmul.f32 0.5, %v2069
        %v2071 = vsub.f32 1.5, %v2070
        %v2072 = vmul.f32 %v2067, %v2071
        %vm2073 = vweird.f32 %v2065
        %vm2074 = vweird.f32 %v2067
        %vm2075 = vmor %vm2073, %vm2074
        %v2076 = vsel %vm2075, %v2067, %v2072
        %v2077 = vrsqrt.pop %v2066
        %v2078 = vmul.f32 %v2077, %v2066
        %v2079 = vmul.f32 %v2078, %v2077
        %v2080 = vmul.f32 0.5, %v2079
        %v2081 = vsub.f32 1.5, %v2080
        %v2082 = vmul.f32 %v2077, %v2081
        %vm2083 = vweird.f32 %v2066
        %vm2084 = vweird.f32 %v2077
        %vm2085 = vmor %vm2083, %vm2084
        %v2086 = vsel %vm2085, %v2077, %v2082
        %v2087 = vmul.f32 %v2063, %v2076
        %v2088 = vmul.f32 %v2064, %v2086
        %v2090 = vperm.slane %v2039, 0
        %v2092 = vmul.f32 %v2087, %v2090
        %v2093 = vmul.f32 %v2088, %v2090
        %v2095 = vperm.slane %v2040, 0
        %v2097 = vadd.f32 %v2092, %v2095
        %v2098 = vadd.f32 %v2093, %v2095
        %2099 = vst.msk [vmem:[#allocation2] sm:$0xff] %vm1197, %v2097
        %2100 = vst.msk [vmem:[#allocation2 + $0x8] sm:$0xff] %vm1197, %v2098
        %p2101 = scmp.eq.s32.totalorder %s45, 1
        // Predicated region
        $region157: #{tpu_custom_call.1} parent=111 // pred_check
          %p2102 = pneg %p2101
        $region158: #{tpu_custom_call.1} parent=111 // pred_check_branch
          %2104 = sbr.rel (%p2102) target = $region160
        $region159: #{tpu_custom_call.1} parent=111 // pred_region
          %v2106 = vrot.slane %v2098, 7
          %vm2108 = vcmask 1040384
          %v2109 = vsel %vm2108, %v2097, %v2106
          %v2110 = vld [vmem:[#allocation19] sm:$0xff]
          %v2111 = vld [vmem:[#allocation19 + $0x8] sm:$0xff]
          %v2112 = vld [vmem:[#allocation19 + $0x10] sm:$0xff]
          %v2113 = vld [vmem:[#allocation19 + $0x18] sm:$0xff]
          %v2114 = vld [vmem:[%s22] sm:$0x1]
          %v2116 = vperm.slane %v2114, 0
          %v2119 = vsel %vm1197, %v2109, 0
          %2121 = vmatpush.msra.mxu0 0.0
          %2122 = vmatpush.msra.mxu0 0.0
          %2123 = vmatpush.msra.mxu0 0.0
          %2124 = vmatpush.msra.mxu0 0.0
          %2125 = vmatpush.msra.mxu0 0.0
          %2126 = vmatpush.msra.mxu0 0.0
          %2127 = vmatpush.msra.mxu0 0.0
          %2128 = vmatpush.msra.mxu0 0.0
          %2129 = vmatpush.msra.mxu0 0.0
          %2130 = vmatpush.msra.mxu0 0.0
          %2131 = vmatpush.msra.mxu0 0.0
          %2132 = vmatpush.msra.mxu0 0.0
          %2133 = vmatpush.msra.mxu0 %v2113
          %2134 = vmatpush.msra.mxu0 %v2112
          %2135 = vmatpush.msra.mxu0 %v2111
          %2136 = vmatpush.msra.mxu0 %v2110
          %2137 = vmatmul.f32.gmra.mxu0 %v2119
          %v2138 = vpop.f32.mrf.mxu0
          %v2139 = vadd.f32 %v2116, %v2138
          %2140 = vdwg.mxu0
          %2141 = vst [vmem:[#allocation21] sm:$0x3] %v2139
        $region160: #{tpu_custom_call.1} parent=111 // pred_fallthru
          _
        // Predicated region
        $region161: #{tpu_custom_call.1} parent=111 // pred_check
          %p2142 = pneg %p621
        $region162: #{tpu_custom_call.1} parent=111 // pred_check_branch
          %2144 = sbr.rel (%p2142) target = $region164
        $region163: #{tpu_custom_call.1} parent=111 // pred_region
          %2146 = vsyncadd [#allocation6], 0
          %s2148 = sshll.u32 [#allocation21], 4
          %s2149 = int_to_ptr.vmem [resolvable:$true] %s2148
          %s2150 = sshll.u32 %s23, 4
          %s2151 = int_to_ptr.hbm [resolvable:$true] %s2150
          %2153 = dma.vmem_to_hbm [thread:$0]  %s2149, 32, %s2151, [#allocation6]
        $region164: #{tpu_custom_call.1} parent=111 // pred_fallthru
          _
        // Predicated region
        $region165: #{tpu_custom_call.1} parent=111 // pred_check
          %p2154 = pneg %p621
        $region166: #{tpu_custom_call.1} parent=111 // pred_check_branch
          %2156 = sbr.rel (%p2154) target = $region168
        $region167: #{tpu_custom_call.1} parent=111 // pred_region
          %2158 = dma.done [#allocation6], 32
        $region168: #{tpu_custom_call.1} parent=111 // pred_fallthru
          _
      $region112: #{tpu_custom_call.1} parent=5 // pred_fallthru
        _
      %p2159 = scmp.le.s32.totalorder 2, %s40
      // Predicated region
      $region169: #{tpu_custom_call.1} parent=5 // pred_check
        %p2160 = pneg %p2159
      $region170: #{tpu_custom_call.1} parent=5 // pred_check_branch
        %2162 = sbr.rel (%p2160) target = $region172
      $region171: #{tpu_custom_call.1} parent=5 // pred_region
        %s2163 = ssub.s32 %s40, 2
      $region172: #{tpu_custom_call.1} parent=5 // pred_fallthru
        _
    $region6: #{tpu_custom_call.1} parent=1 // loop_footer
      %s44 = sadd.s32 1, %s40
    $region7: #{tpu_custom_call.1} parent=1 // loop_footer_branch
      %39 = sbr.rel target = $region3
    $region8: #{tpu_custom_call.1} parent=1 // loop_exit
      _
    %2164 = vsyncpa [#allocation5], 1
    %s2165 = scalar_lea.sflag [#allocation5], 1
    %2166 = vsyncpa %s2165, 1
    %2167 = vsyncpa [#allocation8], 1
    %2168 = vsyncpa [#allocation11], 1
    %2169 = vsyncpa [#allocation14], 1
    %s2170 = scalar_lea.sflag [#allocation14], 1
    %2171 = vsyncpa %s2170, 1
    %2172 = vsyncpa [#allocation17], 1
    %s2173 = scalar_lea.sflag [#allocation17], 1
    %2174 = vsyncpa %s2173, 1
    %2175 = vsyncpa [#allocation20], 1
    %2176 = vsyncpa [#allocation6], 1
    %s2177 = scalar_lea.sflag [#allocation6], 1
    %2178 = vsyncpa %s2177, 1

</llo_original>
